<compile_context>
chip_gen: v7x
topology: tpu7x:2x2x1
jax: 0.10.0
libtpu: 0.0.40
codegen_flags: <defaults>
</compile_context>

<pallas_src>
import math

import jax
import jax.numpy as jnp
import numpy as np
from jax.experimental import pallas as pl
from jax.experimental.pallas import tpu as pltpu


# ----------------------------- Pallas kernel --------------------------------
def make_time_embedding_kernel(TB, T_pad):
    """TB: batch-tile rows per grid step. T_pad: lane-padded table length."""

    def kernel(t_ref, table_ref, w1_ref, b1_ref, w2_ref, b2_ref, o_ref):
        # ---- one-hot gather on the MXU (exact: weights are exactly 0/1).
        # Bounds-safe: t >= T_pad (or t < 0) simply yields an all-zero row.
        t = t_ref[...]                                               # (TB, 1) int32
        col = jax.lax.broadcasted_iota(jnp.int32, (TB, T_pad), 1)    # (TB, T_pad)
        onehot = (col == t).astype(jnp.float32)
        emb = jnp.dot(onehot, table_ref[...],
                      preferred_element_type=jnp.float32)            # (TB, d_model) f32

        # ---- Linear(d_model, dim): bf16 MXU operands, f32 accumulation.
        h1 = jnp.dot(emb.astype(jnp.bfloat16), w1_ref[...],
                     preferred_element_type=jnp.float32)
        h1 = h1 + b1_ref[...]                                        # f32 bias add (VPU)

        # ---- SiLU in f32: x * sigmoid(x); sigmoid via tanh (single EUP op).
        a1 = h1 * (0.5 * (jnp.tanh(0.5 * h1) + 1.0))

        # ---- Linear(dim, dim): bf16 operands, f32 accumulation.
        h2 = jnp.dot(a1.astype(jnp.bfloat16), w2_ref[...],
                     preferred_element_type=jnp.float32)
        h2 = h2 + b2_ref[...]

        o_ref[...] = h2.astype(o_ref.dtype)                          # lane-dense store

    return kernel


# ------------------------------ call builder ---------------------------------
def _build_call(B, TB, T_pad, d_model, dim, out_dtype, single_buffer_consts):
    # Single-buffer blocks whose index_map is constant across the grid.
    pm = dict(pipeline_mode=pl.Buffered(1)) if single_buffer_consts else {}

    def const_spec(shape):
        return pl.BlockSpec(shape, lambda i: (0, 0), **pm)

    grid_spec = pltpu.PrefetchScalarGridSpec(
        num_scalar_prefetch=0,
        grid=(B // TB,),
        in_specs=[
            pl.BlockSpec((TB, 1), lambda i: (i, 0)),     # timestep indices (int32)
            const_spec((T_pad, d_model)),                # sinusoidal table (f32)
            const_spec((d_model, dim)),                  # W1^T (bf16)
            const_spec((1, dim)),                        # b1   (f32)
            const_spec((dim, dim)),                      # W2^T (bf16)
            const_spec((1, dim)),                        # b2   (f32)
        ],
        out_specs=pl.BlockSpec((TB, dim), lambda i: (i, 0)),
    )
    return pl.pallas_call(
        make_time_embedding_kernel(TB, T_pad),
        out_shape=jax.ShapeDtypeStruct((B, dim), out_dtype),
        grid_spec=grid_spec,
        compiler_params=pltpu.CompilerParams(
            dimension_semantics=("parallel",)),          # batch tiles are independent
    )


# ------------------------------ wrapper --------------------------------------
def time_embedding(t, table_f32, w1t_bf16, b1, w2t_bf16, b2,
                   *, tile_b=None, out_dtype=jnp.bfloat16):
    """t: (B,) int timesteps. table_f32: (T, d_model) f32. w*t: pre-transposed (in, out) bf16."""
    B = t.shape[0]
    T, d_model = table_f32.shape
    dim = w1t_bf16.shape[1]

    # 256 rows fills the v6e/v7x MXU; use tile_b=128 on v5e (4x128^2 MXU, 16 MiB scoped VMEM).
    TB = tile_b if tile_b is not None else min(B, 256)
    assert B % TB == 0, "batch must be divisible by the batch tile"
    assert TB == B or TB % 8 == 0, "batch tile must be sublane-aligned"

    # Pad the gather contraction dim to a multiple of 128 (lane-aligned one-hot).
    T_pad = ((T + 127) // 128) * 128
    table_pad = jnp.pad(table_f32.astype(jnp.float32), ((0, T_pad - T), (0, 0)))

    t2d = t.astype(jnp.int32).reshape(B, 1)
    args = (t2d, table_pad, w1t_bf16, b1, w2t_bf16, b2)

    try:
        return _build_call(B, TB, T_pad, d_model, dim, out_dtype, True)(*args)
    except Exception:
        # Fallback for JAX versions without BlockSpec(pipeline_mode=...) support.
        return _build_call(B, TB, T_pad, d_model, dim, out_dtype, False)(*args)


# ---------------------- parameter / table construction -----------------------
def sinusoidal_table(T, d_model):
    """Matches the PyTorch __init__ table (interleaved sin/cos)."""
    assert d_model % 2 == 0
    freqs = np.exp(-(np.arange(0, d_model, 2, dtype=np.float64) / d_model)
                   * math.log(10000.0))                     # (d_model/2,)
    pos = np.arange(T, dtype=np.float64)
    ang = pos[:, None] * freqs[None, :]                     # (T, d_model/2)
    emb = np.stack([np.sin(ang), np.cos(ang)], axis=-1).reshape(T, d_model)
    return jnp.asarray(emb, dtype=jnp.float32)


def xavier_uniform(key, c_out, c_in, gain=1.0):
    bound = gain * math.sqrt(6.0 / (c_in + c_out))
    return jax.random.uniform(key, (c_out, c_in), jnp.float32, -bound, bound)


# ----------------------------- pure-JAX reference ----------------------------
def reference(t, table_f32, W1, b1, W2, b2):
    emb = table_f32[t]                                      # (B, d_model)
    h = emb @ W1.T + b1
    h = h * jax.nn.sigmoid(h)                               # SiLU
    return h @ W2.T + b2


# --------------------------------- main ---------------------------------------
if __name__ == "__main__":
    # Small, lane-dense shapes consistent with the module.
    T, d_model, dim = 1000, 128, 256
    B = 8

    key = jax.random.PRNGKey(0)
    k1, k2, kt = jax.random.split(key, 3)

    table = sinusoidal_table(T, d_model)                    # (T, d_model) f32
    W1 = xavier_uniform(k1, dim, d_model)                   # (out, in), PyTorch layout
    W2 = xavier_uniform(k2, dim, dim)
    b1 = jnp.zeros((1, dim), jnp.float32)
    b2 = jnp.zeros((1, dim), jnp.float32)

    t = jax.random.randint(kt, (B,), 0, T, dtype=jnp.int32)

    out = time_embedding(
        t,
        table,                                              # f32 table (kept f32 in VMEM)
        W1.T.astype(jnp.bfloat16), b1,                      # (in, out) bf16 weights
        W2.T.astype(jnp.bfloat16), b2,
    )
    out = jax.block_until_ready(out)

    ref = jax.block_until_ready(reference(t, table, W1, b1, W2, b2))
    assert out.shape == (B, dim)
    np.testing.assert_allclose(np.asarray(out.astype(jnp.float32)), np.asarray(ref),
                               rtol=2e-2, atol=2e-2)

    print("KERNEL_OK")
</pallas_src>

<mosaic_0001>
module attributes {stable_mosaic.version = 11 : i64} {
  func.func @kernel(%arg0: i32, %arg1: memref<8x1xi32, #tpu.memory_space<vmem>>, %arg2: memref<1024x128xf32, #tpu.memory_space<vmem>>, %arg3: memref<128x256xbf16, #tpu.memory_space<vmem>>, %arg4: memref<1x256xf32, #tpu.memory_space<vmem>>, %arg5: memref<256x256xbf16, #tpu.memory_space<vmem>>, %arg6: memref<1x256xf32, #tpu.memory_space<vmem>>, %arg7: memref<8x256xbf16, #tpu.memory_space<vmem>>) attributes {dimension_semantics = [#tpu.dimension_semantics<parallel>], iteration_bounds = array<i64: 1>, scalar_prefetch = 0 : i64, scratch_operands = 0 : i64, tpu.core_type = #tpu.core_type<tc>, window_params = [{transform_indices = @transform_0, window_bounds = array<i64: 8, 1>}, {pipeline_mode = #tpu.pipeline_mode<synchronous>, transform_indices = @transform_1, window_bounds = array<i64: 1024, 128>}, {pipeline_mode = #tpu.pipeline_mode<synchronous>, transform_indices = @transform_2, window_bounds = array<i64: 128, 256>}, {pipeline_mode = #tpu.pipeline_mode<synchronous>, transform_indices = @transform_3, window_bounds = array<i64: 1, 256>}, {pipeline_mode = #tpu.pipeline_mode<synchronous>, transform_indices = @transform_4, window_bounds = array<i64: 256, 256>}, {pipeline_mode = #tpu.pipeline_mode<synchronous>, transform_indices = @transform_5, window_bounds = array<i64: 1, 256>}, {transform_indices = @transform_6, window_bounds = array<i64: 8, 256>}]} {
    %c0 = arith.constant 0 : index
    %c0_0 = arith.constant 0 : index
    %0 = vector.load %arg1[%c0, %c0_0] : memref<8x1xi32, #tpu.memory_space<vmem>>, vector<8x1xi32>
    %1 = tpu.iota {dimensions = array<i32: 1>} : vector<8x1024xi32>
    %2 = vector.broadcast %0 : vector<8x1xi32> to vector<8x1024xi32>
    %3 = arith.cmpi eq, %1, %2 : vector<8x1024xi32>
    %4 = arith.extui %3 : vector<8x1024xi1> to vector<8x1024xi32>
    %5 = arith.sitofp %4 : vector<8x1024xi32> to vector<8x1024xf32>
    %c0_1 = arith.constant 0 : index
    %c0_2 = arith.constant 0 : index
    %6 = vector.load %arg2[%c0_1, %c0_2] : memref<1024x128xf32, #tpu.memory_space<vmem>>, vector<1024x128xf32>
    %cst = arith.constant dense<0.000000e+00> : vector<8x128xf32>
    %7 = tpu.matmul %5, %6, %cst {dimension_numbers = #tpu.dot_dimension_numbers<[1], [0], [0], [1], [0, 0, 1, 1], [], []>} : vector<8x1024xf32>, vector<1024x128xf32>, vector<8x128xf32> -> vector<8x128xf32>
    %8 = arith.truncf %7 : vector<8x128xf32> to vector<8x128xbf16>
    %c0_3 = arith.constant 0 : index
    %c0_4 = arith.constant 0 : index
    %9 = vector.load %arg3[%c0_3, %c0_4] : memref<128x256xbf16, #tpu.memory_space<vmem>>, vector<128x256xbf16>
    %cst_5 = arith.constant dense<0.000000e+00> : vector<8x256xf32>
    %10 = tpu.matmul %8, %9, %cst_5 {dimension_numbers = #tpu.dot_dimension_numbers<[1], [0], [0], [1], [0, 0, 1, 1], [], []>} : vector<8x128xbf16>, vector<128x256xbf16>, vector<8x256xf32> -> vector<8x256xf32>
    %c0_6 = arith.constant 0 : index
    %c0_7 = arith.constant 0 : index
    %11 = vector.load %arg4[%c0_6, %c0_7] : memref<1x256xf32, #tpu.memory_space<vmem>>, vector<1x256xf32>
    %12 = vector.broadcast %11 : vector<1x256xf32> to vector<8x256xf32>
    %13 = arith.addf %10, %12 : vector<8x256xf32>
    %cst_8 = arith.constant 5.000000e-01 : f32
    %14 = vector.broadcast %cst_8 : f32 to vector<8x256xf32>
    %15 = arith.mulf %14, %13 : vector<8x256xf32>
    %16 = math.tanh %15 : vector<8x256xf32>
    %cst_9 = arith.constant 1.000000e+00 : f32
    %17 = vector.broadcast %cst_9 : f32 to vector<8x256xf32>
    %18 = arith.addf %16, %17 : vector<8x256xf32>
    %cst_10 = arith.constant 5.000000e-01 : f32
    %19 = vector.broadcast %cst_10 : f32 to vector<8x256xf32>
    %20 = arith.mulf %19, %18 : vector<8x256xf32>
    %21 = arith.mulf %13, %20 : vector<8x256xf32>
    %22 = arith.truncf %21 : vector<8x256xf32> to vector<8x256xbf16>
    %c0_11 = arith.constant 0 : index
    %c0_12 = arith.constant 0 : index
    %23 = vector.load %arg5[%c0_11, %c0_12] : memref<256x256xbf16, #tpu.memory_space<vmem>>, vector<256x256xbf16>
    %cst_13 = arith.constant dense<0.000000e+00> : vector<8x256xf32>
    %24 = tpu.matmul %22, %23, %cst_13 {dimension_numbers = #tpu.dot_dimension_numbers<[1], [0], [0], [1], [0, 0, 1, 1], [], []>} : vector<8x256xbf16>, vector<256x256xbf16>, vector<8x256xf32> -> vector<8x256xf32>
    %c0_14 = arith.constant 0 : index
    %c0_15 = arith.constant 0 : index
    %25 = vector.load %arg6[%c0_14, %c0_15] : memref<1x256xf32, #tpu.memory_space<vmem>>, vector<1x256xf32>
    %26 = vector.broadcast %25 : vector<1x256xf32> to vector<8x256xf32>
    %27 = arith.addf %24, %26 : vector<8x256xf32>
    %28 = arith.truncf %27 : vector<8x256xf32> to vector<8x256xbf16>
    %c0_16 = arith.constant 0 : index
    %c0_17 = arith.constant 0 : index
    %29 = vector.load %arg7[%c0_16, %c0_17] : memref<8x256xbf16, #tpu.memory_space<vmem>>, vector<8x256xbf16>
    tpu.vector_store %arg7[%c0_16, %c0_17], %28 {strides = array<i32>} : memref<8x256xbf16, #tpu.memory_space<vmem>>, vector<8x256xbf16>,
    return
  }
  func.func @transform_0(%arg0: i32) -> (i32, i32) {
    %c0_i32 = arith.constant 0 : i32
    %c0_i32_0 = arith.constant 0 : i32
    return %arg0, %c0_i32 : i32, i32
  }
  func.func @transform_1(%arg0: i32) -> (i32, i32) {
    %c0_i32 = arith.constant 0 : i32
    %c0_i32_0 = arith.constant 0 : i32
    %c0_i32_1 = arith.constant 0 : i32
    return %c0_i32, %c0_i32_0 : i32, i32
  }
  func.func @transform_2(%arg0: i32) -> (i32, i32) {
    %c0_i32 = arith.constant 0 : i32
    %c0_i32_0 = arith.constant 0 : i32
    %c0_i32_1 = arith.constant 0 : i32
    return %c0_i32, %c0_i32_0 : i32, i32
  }
  func.func @transform_3(%arg0: i32) -> (i32, i32) {
    %c0_i32 = arith.constant 0 : i32
    %c0_i32_0 = arith.constant 0 : i32
    %c0_i32_1 = arith.constant 0 : i32
    return %c0_i32, %c0_i32_0 : i32, i32
  }
  func.func @transform_4(%arg0: i32) -> (i32, i32) {
    %c0_i32 = arith.constant 0 : i32
    %c0_i32_0 = arith.constant 0 : i32
    %c0_i32_1 = arith.constant 0 : i32
    return %c0_i32, %c0_i32_0 : i32, i32
  }
  func.func @transform_5(%arg0: i32) -> (i32, i32) {
    %c0_i32 = arith.constant 0 : i32
    %c0_i32_0 = arith.constant 0 : i32
    %c0_i32_1 = arith.constant 0 : i32
    return %c0_i32, %c0_i32_0 : i32, i32
  }
  func.func @transform_6(%arg0: i32) -> (i32, i32) {
    %c0_i32 = arith.constant 0 : i32
    %c0_i32_0 = arith.constant 0 : i32
    return %arg0, %c0_i32 : i32, i32
  }
}

module attributes {stable_mosaic.version = 11 : i64} {
  func.func @kernel(%arg0: i32, %arg1: memref<8x1xi32, #tpu.memory_space<vmem>>, %arg2: memref<1024x128xf32, #tpu.memory_space<vmem>>, %arg3: memref<128x256xbf16, #tpu.memory_space<vmem>>, %arg4: memref<1x256xf32, #tpu.memory_space<vmem>>, %arg5: memref<256x256xbf16, #tpu.memory_space<vmem>>, %arg6: memref<1x256xf32, #tpu.memory_space<vmem>>, %arg7: memref<8x256xbf16, #tpu.memory_space<vmem>>) attributes {dimension_semantics = [#tpu.dimension_semantics<parallel>], iteration_bounds = array<i64: 1>, scalar_prefetch = 0 : i64, scratch_operands = 0 : i64, tpu.core_type = #tpu.core_type<tc>, window_params = [{transform_indices = @transform_0, window_bounds = array<i64: 8, 1>}, {pipeline_mode = #tpu.pipeline_mode<synchronous>, transform_indices = @transform_1, window_bounds = array<i64: 1024, 128>}, {pipeline_mode = #tpu.pipeline_mode<synchronous>, transform_indices = @transform_2, window_bounds = array<i64: 128, 256>}, {pipeline_mode = #tpu.pipeline_mode<synchronous>, transform_indices = @transform_3, window_bounds = array<i64: 1, 256>}, {pipeline_mode = #tpu.pipeline_mode<synchronous>, transform_indices = @transform_4, window_bounds = array<i64: 256, 256>}, {pipeline_mode = #tpu.pipeline_mode<synchronous>, transform_indices = @transform_5, window_bounds = array<i64: 1, 256>}, {transform_indices = @transform_6, window_bounds = array<i64: 8, 256>}]} {
    %c0 = arith.constant 0 : index
    %c0_0 = arith.constant 0 : index
    %0 = vector.load %arg1[%c0, %c0_0] : memref<8x1xi32, #tpu.memory_space<vmem>>, vector<8x1xi32>
    %1 = tpu.iota {dimensions = array<i32: 1>} : vector<8x1024xi32>
    %2 = vector.broadcast %0 : vector<8x1xi32> to vector<8x1024xi32>
    %3 = arith.cmpi eq, %1, %2 : vector<8x1024xi32>
    %4 = arith.extui %3 : vector<8x1024xi1> to vector<8x1024xi32>
    %5 = arith.sitofp %4 : vector<8x1024xi32> to vector<8x1024xf32>
    %c0_1 = arith.constant 0 : index
    %c0_2 = arith.constant 0 : index
    %6 = vector.load %arg2[%c0_1, %c0_2] : memref<1024x128xf32, #tpu.memory_space<vmem>>, vector<1024x128xf32>
    %cst = arith.constant dense<0.000000e+00> : vector<8x128xf32>
    %7 = tpu.matmul %5, %6, %cst {dimension_numbers = #tpu.dot_dimension_numbers<[1], [0], [0], [1], [0, 0, 1, 1], [], []>} : vector<8x1024xf32>, vector<1024x128xf32>, vector<8x128xf32> -> vector<8x128xf32>
    %8 = arith.truncf %7 : vector<8x128xf32> to vector<8x128xbf16>
    %c0_3 = arith.constant 0 : index
    %c0_4 = arith.constant 0 : index
    %9 = vector.load %arg3[%c0_3, %c0_4] : memref<128x256xbf16, #tpu.memory_space<vmem>>, vector<128x256xbf16>
    %cst_5 = arith.constant dense<0.000000e+00> : vector<8x256xf32>
    %10 = tpu.matmul %8, %9, %cst_5 {dimension_numbers = #tpu.dot_dimension_numbers<[1], [0], [0], [1], [0, 0, 1, 1], [], []>} : vector<8x128xbf16>, vector<128x256xbf16>, vector<8x256xf32> -> vector<8x256xf32>
    %c0_6 = arith.constant 0 : index
    %c0_7 = arith.constant 0 : index
    %11 = vector.load %arg4[%c0_6, %c0_7] : memref<1x256xf32, #tpu.memory_space<vmem>>, vector<1x256xf32>
    %12 = vector.broadcast %11 : vector<1x256xf32> to vector<8x256xf32>
    %13 = arith.addf %10, %12 : vector<8x256xf32>
    %cst_8 = arith.constant 5.000000e-01 : f32
    %14 = vector.broadcast %cst_8 : f32 to vector<8x256xf32>
    %15 = arith.mulf %14, %13 : vector<8x256xf32>
    %16 = math.tanh %15 : vector<8x256xf32>
    %cst_9 = arith.constant 1.000000e+00 : f32
    %17 = vector.broadcast %cst_9 : f32 to vector<8x256xf32>
    %18 = arith.addf %16, %17 : vector<8x256xf32>
    %cst_10 = arith.constant 5.000000e-01 : f32
    %19 = vector.broadcast %cst_10 : f32 to vector<8x256xf32>
    %20 = arith.mulf %19, %18 : vector<8x256xf32>
    %21 = arith.mulf %13, %20 : vector<8x256xf32>
    %22 = arith.truncf %21 : vector<8x256xf32> to vector<8x256xbf16>
    %c0_11 = arith.constant 0 : index
    %c0_12 = arith.constant 0 : index
    %23 = vector.load %arg5[%c0_11, %c0_12] : memref<256x256xbf16, #tpu.memory_space<vmem>>, vector<256x256xbf16>
    %cst_13 = arith.constant dense<0.000000e+00> : vector<8x256xf32>
    %24 = tpu.matmul %22, %23, %cst_13 {dimension_numbers = #tpu.dot_dimension_numbers<[1], [0], [0], [1], [0, 0, 1, 1], [], []>} : vector<8x256xbf16>, vector<256x256xbf16>, vector<8x256xf32> -> vector<8x256xf32>
    %c0_14 = arith.constant 0 : index
    %c0_15 = arith.constant 0 : index
    %25 = vector.load %arg6[%c0_14, %c0_15] : memref<1x256xf32, #tpu.memory_space<vmem>>, vector<1x256xf32>
    %26 = vector.broadcast %25 : vector<1x256xf32> to vector<8x256xf32>
    %27 = arith.addf %24, %26 : vector<8x256xf32>
    %28 = arith.truncf %27 : vector<8x256xf32> to vector<8x256xbf16>
    %c0_16 = arith.constant 0 : index
    %c0_17 = arith.constant 0 : index
    %29 = vector.load %arg7[%c0_16, %c0_17] : memref<8x256xbf16, #tpu.memory_space<vmem>>, vector<8x256xbf16>
    tpu.vector_store %arg7[%c0_16, %c0_17], %28 {strides = array<i32>} : memref<8x256xbf16, #tpu.memory_space<vmem>>, vector<8x256xbf16>,
    return
  }
  func.func @transform_0(%arg0: i32) -> (i32, i32) {
    %c0_i32 = arith.constant 0 : i32
    %c0_i32_0 = arith.constant 0 : i32
    return %arg0, %c0_i32 : i32, i32
  }
  func.func @transform_1(%arg0: i32) -> (i32, i32) {
    %c0_i32 = arith.constant 0 : i32
    %c0_i32_0 = arith.constant 0 : i32
    %c0_i32_1 = arith.constant 0 : i32
    return %c0_i32, %c0_i32_0 : i32, i32
  }
  func.func @transform_2(%arg0: i32) -> (i32, i32) {
    %c0_i32 = arith.constant 0 : i32
    %c0_i32_0 = arith.constant 0 : i32
    %c0_i32_1 = arith.constant 0 : i32
    return %c0_i32, %c0_i32_0 : i32, i32
  }
  func.func @transform_3(%arg0: i32) -> (i32, i32) {
    %c0_i32 = arith.constant 0 : i32
    %c0_i32_0 = arith.constant 0 : i32
    %c0_i32_1 = arith.constant 0 : i32
    return %c0_i32, %c0_i32_0 : i32, i32
  }
  func.func @transform_4(%arg0: i32) -> (i32, i32) {
    %c0_i32 = arith.constant 0 : i32
    %c0_i32_0 = arith.constant 0 : i32
    %c0_i32_1 = arith.constant 0 : i32
    return %c0_i32, %c0_i32_0 : i32, i32
  }
  func.func @transform_5(%arg0: i32) -> (i32, i32) {
    %c0_i32 = arith.constant 0 : i32
    %c0_i32_0 = arith.constant 0 : i32
    %c0_i32_1 = arith.constant 0 : i32
    return %c0_i32, %c0_i32_0 : i32, i32
  }
  func.func @transform_6(%arg0: i32) -> (i32, i32) {
    %c0_i32 = arith.constant 0 : i32
    %c0_i32_0 = arith.constant 0 : i32
    return %arg0, %c0_i32 : i32, i32
  }
}

</mosaic_0001>

<llo_original>
// kernel: tpu_custom_call.1
$region0: #{tpu_custom_call.1}
  #allocation0 [shape = 'u32[]', space=smem, size = 0x4, offset = 0x4, fixed_abs, tag = 'smem constant byte address 0x4 - core index']
  #allocation1 [shape = 'u32[144,128]{1,0:T(1,128)}', space=vmem, size = 0x12000, scoped, tag = 'internal scratch']
  %s0 = inlined_call_operand.vmem [shape: s32[8,1], index: 0, kind: input, shape index: {}]
  %s1 = inlined_call_operand.hbm [shape: f32[1024,128], index: 1, kind: input, shape index: {}]
  %s2 = inlined_call_operand.hbm [shape: bf16[128,256], index: 2, kind: input, shape index: {}]
  %s3 = inlined_call_operand.vmem [shape: f32[1,256], index: 3, kind: input, shape index: {}]
  %s4 = inlined_call_operand.hbm [shape: bf16[256,256], index: 4, kind: input, shape index: {}]
  %s5 = inlined_call_operand.vmem [shape: f32[1,256], index: 5, kind: input, shape index: {}]
  %s6 = inlined_call_operand.hbm [shape: bf16[8,256], index: 6, kind: output, shape index: {}]
  %s7 = sld [smem:[#allocation0]]
  $region46: #{tpu_custom_call.1} parent=0
    _
  %s9 = ssub.s32 1, %s7
  %s10 = scalar_select 0, %s9, %s7
  $region1: #{tpu_custom_call.1} parent=0
    #allocation2 [shape = 'u8[524288]{0}', space=vmem, size = 0x80000, scoped, tag = 'input window, operand 1, single buffered']
    #allocation3 [shape = 's32[1]{0}', space=sflag, size = 0x4, scoped, tag = 'scoped memory for tpu_custom_call.1']
    #allocation4 [shape = 's32[1]{0}', space=sflag, size = 0x4, scoped, tag = 'scoped memory for tpu_custom_call.1']
    #allocation5 [shape = 'u8[65536]{0}', space=vmem, size = 0x10000, scoped, tag = 'input window, operand 2, single buffered']
    #allocation6 [shape = 's32[1]{0}', space=sflag, size = 0x4, scoped, tag = 'scoped memory for tpu_custom_call.1']
    #allocation7 [shape = 'u8[131072]{0}', space=vmem, size = 0x20000, scoped, tag = 'input window, operand 4, single buffered']
    #allocation8 [shape = 'u8[4096]{0}', space=vmem, size = 0x1000, scoped, tag = 'output window, operand 0, single buffered']
    %11 = vsyncpa [#allocation3], 0
    %12 = vsyncpa [#allocation6], 0
    %13 = vsyncpa [#allocation4], 0
    // Predicated region
    $region2: #{tpu_custom_call.1} parent=1 // pred_check
      _
    $region3: #{tpu_custom_call.1} parent=1 // pred_check_branch
      %15 = sbr.rel (0) target = $region5
    $region4: #{tpu_custom_call.1} parent=1 // pred_region
      _
    $region5: #{tpu_custom_call.1} parent=1 // pred_fallthru
      _
    // Predicated region
    $region6: #{tpu_custom_call.1} parent=1 // pred_check
      _
    $region7: #{tpu_custom_call.1} parent=1 // pred_check_branch
      %17 = sbr.rel (0) target = $region9
    $region8: #{tpu_custom_call.1} parent=1 // pred_region
      %s19 = ssub.s32 16384, 16384
      %20 = vsyncadd [#allocation3], %s19
      %s21 = sshll.u32 [#allocation2], 4
      %s22 = int_to_ptr.vmem [resolvable:$true] %s21
      %27 = dma.hbm_to_vmem [thread:$0]  %s1, 16384, %s22, [#allocation3], 128, 128, 8
    $region9: #{tpu_custom_call.1} parent=1 // pred_fallthru
      _
    // Predicated region
    $region10: #{tpu_custom_call.1} parent=1 // pred_check
      _
    $region11: #{tpu_custom_call.1} parent=1 // pred_check_branch
      %29 = sbr.rel (0) target = $region13
    $region12: #{tpu_custom_call.1} parent=1 // pred_region
      %s31 = ssub.s32 2048, 2048
      %32 = vsyncadd [#allocation6], %s31
      %s33 = sshll.u32 [#allocation5], 4
      %s34 = int_to_ptr.vmem [resolvable:$true] %s33
      %39 = dma.hbm_to_vmem [thread:$0]  %s2, 2048, %s34, [#allocation6], 128, 128, 8
    $region13: #{tpu_custom_call.1} parent=1 // pred_fallthru
      _
    // Predicated region
    $region14: #{tpu_custom_call.1} parent=1 // pred_check
      _
    $region15: #{tpu_custom_call.1} parent=1 // pred_check_branch
      %41 = sbr.rel (0) target = $region17
    $region16: #{tpu_custom_call.1} parent=1 // pred_region
      _
    $region17: #{tpu_custom_call.1} parent=1 // pred_fallthru
      _
    // Predicated region
    $region18: #{tpu_custom_call.1} parent=1 // pred_check
      _
    $region19: #{tpu_custom_call.1} parent=1 // pred_check_branch
      %43 = sbr.rel (0) target = $region21
    $region20: #{tpu_custom_call.1} parent=1 // pred_region
      %s45 = ssub.s32 4096, 4096
      %46 = vsyncadd [#allocation6], %s45
      %s47 = sshll.u32 [#allocation7], 4
      %s48 = int_to_ptr.vmem [resolvable:$true] %s47
      %53 = dma.hbm_to_vmem [thread:$0]  %s4, 4096, %s48, [#allocation6], 128, 128, 8
    $region21: #{tpu_custom_call.1} parent=1 // pred_fallthru
      _
    // Predicated region
    $region22: #{tpu_custom_call.1} parent=1 // pred_check
      _
    $region23: #{tpu_custom_call.1} parent=1 // pred_check_branch
      %55 = sbr.rel (0) target = $region25
    $region24: #{tpu_custom_call.1} parent=1 // pred_region
      _
    $region25: #{tpu_custom_call.1} parent=1 // pred_fallthru
      _
    // Predicated region
    $region26: #{tpu_custom_call.1} parent=1 // pred_check
      _
    $region27: #{tpu_custom_call.1} parent=1 // pred_check_branch
      %57 = sbr.rel (0) target = $region29
    $region28: #{tpu_custom_call.1} parent=1 // pred_region
      %58 = dma.done [#allocation3], 16384
    $region29: #{tpu_custom_call.1} parent=1 // pred_fallthru
      _
    // Predicated region
    $region30: #{tpu_custom_call.1} parent=1 // pred_check
      _
    $region31: #{tpu_custom_call.1} parent=1 // pred_check_branch
      %60 = sbr.rel (0) target = $region33
    $region32: #{tpu_custom_call.1} parent=1 // pred_region
      %61 = dma.done [#allocation6], 2048
    $region33: #{tpu_custom_call.1} parent=1 // pred_fallthru
      _
    // Predicated region
    $region34: #{tpu_custom_call.1} parent=1 // pred_check
      _
    $region35: #{tpu_custom_call.1} parent=1 // pred_check_branch
      %63 = sbr.rel (0) target = $region37
    $region36: #{tpu_custom_call.1} parent=1 // pred_region
      %64 = dma.done [#allocation6], 4096
    $region37: #{tpu_custom_call.1} parent=1 // pred_fallthru
      _
    %v66 = vld [vmem:[%s0] sm:$0xff]
    %v67 = vlaneseq
    %v68 = vand.u32 %v67, 127
    %v69 = vadd.s32 %v68, 128
    %v70 = vadd.s32 %v68, 256
    %v71 = vadd.s32 %v68, 384
    %v72 = vadd.s32 %v68, 512
    %v73 = vadd.s32 %v68, 640
    %v74 = vadd.s32 %v68, 768
    %v75 = vadd.s32 %v68, 896
    %76 = vset.pattern.permute.xlu0 0
    %77 = vperm.xlu0 %76, %v66
    %v78 = vpop.permute.xlu0 %77
    %vm79 = vcmp.eq.s32.totalorder %v68, %v78
    %vm80 = vcmp.eq.s32.totalorder %v69, %v78
    %vm81 = vcmp.eq.s32.totalorder %v70, %v78
    %vm82 = vcmp.eq.s32.totalorder %v71, %v78
    %vm83 = vcmp.eq.s32.totalorder %v72, %v78
    %vm84 = vcmp.eq.s32.totalorder %v73, %v78
    %vm85 = vcmp.eq.s32.totalorder %v74, %v78
    %vm86 = vcmp.eq.s32.totalorder %v75, %v78
    %v87 = vsel %vm79, 1, 0
    %v88 = vsel %vm80, 1, 0
    %v89 = vsel %vm81, 1, 0
    %v90 = vsel %vm82, 1, 0
    %v91 = vsel %vm83, 1, 0
    %v92 = vsel %vm84, 1, 0
    %v93 = vsel %vm85, 1, 0
    %v94 = vsel %vm86, 1, 0
    %v95 = vcvt.s32.f32 %v87
    %v96 = vcvt.s32.f32 %v88
    %v97 = vcvt.s32.f32 %v89
    %v98 = vcvt.s32.f32 %v90
    %v99 = vcvt.s32.f32 %v91
    %v100 = vcvt.s32.f32 %v92
    %v101 = vcvt.s32.f32 %v93
    %v102 = vcvt.s32.f32 %v94
    %v103 = vld [vmem:[#allocation2] sm:$0xff]
    %v104 = vld [vmem:[#allocation2 + $0x8] sm:$0xff]
    %v105 = vld [vmem:[#allocation2 + $0x10] sm:$0xff]
    %v106 = vld [vmem:[#allocation2 + $0x18] sm:$0xff]
    %v107 = vld [vmem:[#allocation2 + $0x20] sm:$0xff]
    %v108 = vld [vmem:[#allocation2 + $0x28] sm:$0xff]
    %v109 = vld [vmem:[#allocation2 + $0x30] sm:$0xff]
    %v110 = vld [vmem:[#allocation2 + $0x38] sm:$0xff]
    %v111 = vld [vmem:[#allocation2 + $0x40] sm:$0xff]
    %v112 = vld [vmem:[#allocation2 + $0x48] sm:$0xff]
    %v113 = vld [vmem:[#allocation2 + $0x50] sm:$0xff]
    %v114 = vld [vmem:[#allocation2 + $0x58] sm:$0xff]
    %v115 = vld [vmem:[#allocation2 + $0x60] sm:$0xff]
    %v116 = vld [vmem:[#allocation2 + $0x68] sm:$0xff]
    %v117 = vld [vmem:[#allocation2 + $0x70] sm:$0xff]
    %v118 = vld [vmem:[#allocation2 + $0x78] sm:$0xff]
    %v119 = vld [vmem:[#allocation2 + $0x80] sm:$0xff]
    %v120 = vld [vmem:[#allocation2 + $0x88] sm:$0xff]
    %v121 = vld [vmem:[#allocation2 + $0x90] sm:$0xff]
    %v122 = vld [vmem:[#allocation2 + $0x98] sm:$0xff]
    %v123 = vld [vmem:[#allocation2 + $0xa0] sm:$0xff]
    %v124 = vld [vmem:[#allocation2 + $0xa8] sm:$0xff]
    %v125 = vld [vmem:[#allocation2 + $0xb0] sm:$0xff]
    %v126 = vld [vmem:[#allocation2 + $0xb8] sm:$0xff]
    %v127 = vld [vmem:[#allocation2 + $0xc0] sm:$0xff]
    %v128 = vld [vmem:[#allocation2 + $0xc8] sm:$0xff]
    %v129 = vld [vmem:[#allocation2 + $0xd0] sm:$0xff]
    %v130 = vld [vmem:[#allocation2 + $0xd8] sm:$0xff]
    %v131 = vld [vmem:[#allocation2 + $0xe0] sm:$0xff]
    %v132 = vld [vmem:[#allocation2 + $0xe8] sm:$0xff]
    %v133 = vld [vmem:[#allocation2 + $0xf0] sm:$0xff]
    %v134 = vld [vmem:[#allocation2 + $0xf8] sm:$0xff]
    %v135 = vld [vmem:[#allocation2 + $0x100] sm:$0xff]
    %v136 = vld [vmem:[#allocation2 + $0x108] sm:$0xff]
    %v137 = vld [vmem:[#allocation2 + $0x110] sm:$0xff]
    %v138 = vld [vmem:[#allocation2 + $0x118] sm:$0xff]
    %v139 = vld [vmem:[#allocation2 + $0x120] sm:$0xff]
    %v140 = vld [vmem:[#allocation2 + $0x128] sm:$0xff]
    %v141 = vld [vmem:[#allocation2 + $0x130] sm:$0xff]
    %v142 = vld [vmem:[#allocation2 + $0x138] sm:$0xff]
    %v143 = vld [vmem:[#allocation2 + $0x140] sm:$0xff]
    %v144 = vld [vmem:[#allocation2 + $0x148] sm:$0xff]
    %v145 = vld [vmem:[#allocation2 + $0x150] sm:$0xff]
    %v146 = vld [vmem:[#allocation2 + $0x158] sm:$0xff]
    %v147 = vld [vmem:[#allocation2 + $0x160] sm:$0xff]
    %v148 = vld [vmem:[#allocation2 + $0x168] sm:$0xff]
    %v149 = vld [vmem:[#allocation2 + $0x170] sm:$0xff]
    %v150 = vld [vmem:[#allocation2 + $0x178] sm:$0xff]
    %v151 = vld [vmem:[#allocation2 + $0x180] sm:$0xff]
    %v152 = vld [vmem:[#allocation2 + $0x188] sm:$0xff]
    %v153 = vld [vmem:[#allocation2 + $0x190] sm:$0xff]
    %v154 = vld [vmem:[#allocation2 + $0x198] sm:$0xff]
    %v155 = vld [vmem:[#allocation2 + $0x1a0] sm:$0xff]
    %v156 = vld [vmem:[#allocation2 + $0x1a8] sm:$0xff]
    %v157 = vld [vmem:[#allocation2 + $0x1b0] sm:$0xff]
    %v158 = vld [vmem:[#allocation2 + $0x1b8] sm:$0xff]
    %v159 = vld [vmem:[#allocation2 + $0x1c0] sm:$0xff]
    %v160 = vld [vmem:[#allocation2 + $0x1c8] sm:$0xff]
    %v161 = vld [vmem:[#allocation2 + $0x1d0] sm:$0xff]
    %v162 = vld [vmem:[#allocation2 + $0x1d8] sm:$0xff]
    %v163 = vld [vmem:[#allocation2 + $0x1e0] sm:$0xff]
    %v164 = vld [vmem:[#allocation2 + $0x1e8] sm:$0xff]
    %v165 = vld [vmem:[#allocation2 + $0x1f0] sm:$0xff]
    %v166 = vld [vmem:[#allocation2 + $0x1f8] sm:$0xff]
    %v167 = vld [vmem:[#allocation2 + $0x200] sm:$0xff]
    %v168 = vld [vmem:[#allocation2 + $0x208] sm:$0xff]
    %v169 = vld [vmem:[#allocation2 + $0x210] sm:$0xff]
    %v170 = vld [vmem:[#allocation2 + $0x218] sm:$0xff]
    %v171 = vld [vmem:[#allocation2 + $0x220] sm:$0xff]
    %v172 = vld [vmem:[#allocation2 + $0x228] sm:$0xff]
    %v173 = vld [vmem:[#allocation2 + $0x230] sm:$0xff]
    %v174 = vld [vmem:[#allocation2 + $0x238] sm:$0xff]
    %v175 = vld [vmem:[#allocation2 + $0x240] sm:$0xff]
    %v176 = vld [vmem:[#allocation2 + $0x248] sm:$0xff]
    %v177 = vld [vmem:[#allocation2 + $0x250] sm:$0xff]
    %v178 = vld [vmem:[#allocation2 + $0x258] sm:$0xff]
    %v179 = vld [vmem:[#allocation2 + $0x260] sm:$0xff]
    %v180 = vld [vmem:[#allocation2 + $0x268] sm:$0xff]
    %v181 = vld [vmem:[#allocation2 + $0x270] sm:$0xff]
    %v182 = vld [vmem:[#allocation2 + $0x278] sm:$0xff]
    %v183 = vld [vmem:[#allocation2 + $0x280] sm:$0xff]
    %v184 = vld [vmem:[#allocation2 + $0x288] sm:$0xff]
    %v185 = vld [vmem:[#allocation2 + $0x290] sm:$0xff]
    %v186 = vld [vmem:[#allocation2 + $0x298] sm:$0xff]
    %v187 = vld [vmem:[#allocation2 + $0x2a0] sm:$0xff]
    %v188 = vld [vmem:[#allocation2 + $0x2a8] sm:$0xff]
    %v189 = vld [vmem:[#allocation2 + $0x2b0] sm:$0xff]
    %v190 = vld [vmem:[#allocation2 + $0x2b8] sm:$0xff]
    %v191 = vld [vmem:[#allocation2 + $0x2c0] sm:$0xff]
    %v192 = vld [vmem:[#allocation2 + $0x2c8] sm:$0xff]
    %v193 = vld [vmem:[#allocation2 + $0x2d0] sm:$0xff]
    %v194 = vld [vmem:[#allocation2 + $0x2d8] sm:$0xff]
    %v195 = vld [vmem:[#allocation2 + $0x2e0] sm:$0xff]
    %v196 = vld [vmem:[#allocation2 + $0x2e8] sm:$0xff]
    %v197 = vld [vmem:[#allocation2 + $0x2f0] sm:$0xff]
    %v198 = vld [vmem:[#allocation2 + $0x2f8] sm:$0xff]
    %v199 = vld [vmem:[#allocation2 + $0x300] sm:$0xff]
    %v200 = vld [vmem:[#allocation2 + $0x308] sm:$0xff]
    %v201 = vld [vmem:[#allocation2 + $0x310] sm:$0xff]
    %v202 = vld [vmem:[#allocation2 + $0x318] sm:$0xff]
    %v203 = vld [vmem:[#allocation2 + $0x320] sm:$0xff]
    %v204 = vld [vmem:[#allocation2 + $0x328] sm:$0xff]
    %v205 = vld [vmem:[#allocation2 + $0x330] sm:$0xff]
    %v206 = vld [vmem:[#allocation2 + $0x338] sm:$0xff]
    %v207 = vld [vmem:[#allocation2 + $0x340] sm:$0xff]
    %v208 = vld [vmem:[#allocation2 + $0x348] sm:$0xff]
    %v209 = vld [vmem:[#allocation2 + $0x350] sm:$0xff]
    %v210 = vld [vmem:[#allocation2 + $0x358] sm:$0xff]
    %v211 = vld [vmem:[#allocation2 + $0x360] sm:$0xff]
    %v212 = vld [vmem:[#allocation2 + $0x368] sm:$0xff]
    %v213 = vld [vmem:[#allocation2 + $0x370] sm:$0xff]
    %v214 = vld [vmem:[#allocation2 + $0x378] sm:$0xff]
    %v215 = vld [vmem:[#allocation2 + $0x380] sm:$0xff]
    %v216 = vld [vmem:[#allocation2 + $0x388] sm:$0xff]
    %v217 = vld [vmem:[#allocation2 + $0x390] sm:$0xff]
    %v218 = vld [vmem:[#allocation2 + $0x398] sm:$0xff]
    %v219 = vld [vmem:[#allocation2 + $0x3a0] sm:$0xff]
    %v220 = vld [vmem:[#allocation2 + $0x3a8] sm:$0xff]
    %v221 = vld [vmem:[#allocation2 + $0x3b0] sm:$0xff]
    %v222 = vld [vmem:[#allocation2 + $0x3b8] sm:$0xff]
    %v223 = vld [vmem:[#allocation2 + $0x3c0] sm:$0xff]
    %v224 = vld [vmem:[#allocation2 + $0x3c8] sm:$0xff]
    %v225 = vld [vmem:[#allocation2 + $0x3d0] sm:$0xff]
    %v226 = vld [vmem:[#allocation2 + $0x3d8] sm:$0xff]
    %v227 = vld [vmem:[#allocation2 + $0x3e0] sm:$0xff]
    %v228 = vld [vmem:[#allocation2 + $0x3e8] sm:$0xff]
    %v229 = vld [vmem:[#allocation2 + $0x3f0] sm:$0xff]
    %v230 = vld [vmem:[#allocation2 + $0x3f8] sm:$0xff]
    %231 = vmatprep.subr.mxu0 0.0
    %232 = vmatpush1.msra.mxu0 %v103
    %233 = vmatprep.subr.mxu0 0.0
    %234 = vmatpush1.msra.mxu0 %v104
    %235 = vmatprep.subr.mxu0 0.0
    %236 = vmatpush1.msra.mxu0 %v105
    %237 = vmatprep.subr.mxu0 0.0
    %238 = vmatpush1.msra.mxu0 %v106
    %239 = vmatprep.subr.mxu0 0.0
    %240 = vmatpush1.msra.mxu0 %v107
    %241 = vmatprep.subr.mxu0 0.0
    %242 = vmatpush1.msra.mxu0 %v108
    %243 = vmatprep.subr.mxu0 0.0
    %244 = vmatpush1.msra.mxu0 %v109
    %245 = vmatprep.subr.mxu0 0.0
    %246 = vmatpush1.msra.mxu0 %v110
    %247 = vmatprep.subr.mxu0 0.0
    %248 = vmatpush1.msra.mxu0 %v111
    %249 = vmatprep.subr.mxu0 0.0
    %250 = vmatpush1.msra.mxu0 %v112
    %251 = vmatprep.subr.mxu0 0.0
    %252 = vmatpush1.msra.mxu0 %v113
    %253 = vmatprep.subr.mxu0 0.0
    %254 = vmatpush1.msra.mxu0 %v114
    %255 = vmatprep.subr.mxu0 0.0
    %256 = vmatpush1.msra.mxu0 %v115
    %257 = vmatprep.subr.mxu0 0.0
    %258 = vmatpush1.msra.mxu0 %v116
    %259 = vmatprep.subr.mxu0 0.0
    %260 = vmatpush1.msra.mxu0 %v117
    %261 = vmatprep.subr.mxu0 0.0
    %262 = vmatpush1.msra.mxu0 %v118
    %263 = vmatprep.subr.mxu0 0.0
    %264 = vmatpush1.msra.mxu0 %v119
    %265 = vmatprep.subr.mxu0 0.0
    %266 = vmatpush1.msra.mxu0 %v120
    %267 = vmatprep.subr.mxu0 0.0
    %268 = vmatpush1.msra.mxu0 %v121
    %269 = vmatprep.subr.mxu0 0.0
    %270 = vmatpush1.msra.mxu0 %v122
    %271 = vmatprep.subr.mxu0 0.0
    %272 = vmatpush1.msra.mxu0 %v123
    %273 = vmatprep.subr.mxu0 0.0
    %274 = vmatpush1.msra.mxu0 %v124
    %275 = vmatprep.subr.mxu0 0.0
    %276 = vmatpush1.msra.mxu0 %v125
    %277 = vmatprep.subr.mxu0 0.0
    %278 = vmatpush1.msra.mxu0 %v126
    %279 = vmatprep.subr.mxu0 0.0
    %280 = vmatpush1.msra.mxu0 %v127
    %281 = vmatprep.subr.mxu0 0.0
    %282 = vmatpush1.msra.mxu0 %v128
    %283 = vmatprep.subr.mxu0 0.0
    %284 = vmatpush1.msra.mxu0 %v129
    %285 = vmatprep.subr.mxu0 0.0
    %286 = vmatpush1.msra.mxu0 %v130
    %287 = vmatprep.subr.mxu0 0.0
    %288 = vmatpush1.msra.mxu0 %v131
    %289 = vmatprep.subr.mxu0 0.0
    %290 = vmatpush1.msra.mxu0 %v132
    %291 = vmatprep.subr.mxu0 0.0
    %292 = vmatpush1.msra.mxu0 %v133
    %293 = vmatprep.subr.mxu0 0.0
    %294 = vmatpush1.msra.mxu0 %v134
    %295 = vmatprep.mubr.f32.mxu0 %v96
    %296 = vmatmul.mubr.f32.gmra.mrb[0].mxu0 %v95
    %v297 = vpop.f32.mrb[0].mxu0
    %v298 = vadd.f32 0.0, %v297
    %v299 = vpop.f32.mrb[0].mxu0
    %300 = vdwg.mxu0
    %301 = vmatprep.subr.mxu0 0.0
    %302 = vmatpush1.msra.mxu0 %v135
    %303 = vmatprep.subr.mxu0 0.0
    %304 = vmatpush1.msra.mxu0 %v136
    %305 = vmatprep.subr.mxu0 0.0
    %306 = vmatpush1.msra.mxu0 %v137
    %307 = vmatprep.subr.mxu0 0.0
    %308 = vmatpush1.msra.mxu0 %v138
    %309 = vmatprep.subr.mxu0 0.0
    %310 = vmatpush1.msra.mxu0 %v139
    %311 = vmatprep.subr.mxu0 0.0
    %312 = vmatpush1.msra.mxu0 %v140
    %313 = vmatprep.subr.mxu0 0.0
    %314 = vmatpush1.msra.mxu0 %v141
    %315 = vmatprep.subr.mxu0 0.0
    %316 = vmatpush1.msra.mxu0 %v142
    %317 = vmatprep.subr.mxu0 0.0
    %318 = vmatpush1.msra.mxu0 %v143
    %319 = vmatprep.subr.mxu0 0.0
    %320 = vmatpush1.msra.mxu0 %v144
    %321 = vmatprep.subr.mxu0 0.0
    %322 = vmatpush1.msra.mxu0 %v145
    %323 = vmatprep.subr.mxu0 0.0
    %324 = vmatpush1.msra.mxu0 %v146
    %325 = vmatprep.subr.mxu0 0.0
    %326 = vmatpush1.msra.mxu0 %v147
    %327 = vmatprep.subr.mxu0 0.0
    %328 = vmatpush1.msra.mxu0 %v148
    %329 = vmatprep.subr.mxu0 0.0
    %330 = vmatpush1.msra.mxu0 %v149
    %331 = vmatprep.subr.mxu0 0.0
    %332 = vmatpush1.msra.mxu0 %v150
    %333 = vmatprep.subr.mxu0 0.0
    %334 = vmatpush1.msra.mxu0 %v151
    %335 = vmatprep.subr.mxu0 0.0
    %336 = vmatpush1.msra.mxu0 %v152
    %337 = vmatprep.subr.mxu0 0.0
    %338 = vmatpush1.msra.mxu0 %v153
    %339 = vmatprep.subr.mxu0 0.0
    %340 = vmatpush1.msra.mxu0 %v154
    %341 = vmatprep.subr.mxu0 0.0
    %342 = vmatpush1.msra.mxu0 %v155
    %343 = vmatprep.subr.mxu0 0.0
    %344 = vmatpush1.msra.mxu0 %v156
    %345 = vmatprep.subr.mxu0 0.0
    %346 = vmatpush1.msra.mxu0 %v157
    %347 = vmatprep.subr.mxu0 0.0
    %348 = vmatpush1.msra.mxu0 %v158
    %349 = vmatprep.subr.mxu0 0.0
    %350 = vmatpush1.msra.mxu0 %v159
    %351 = vmatprep.subr.mxu0 0.0
    %352 = vmatpush1.msra.mxu0 %v160
    %353 = vmatprep.subr.mxu0 0.0
    %354 = vmatpush1.msra.mxu0 %v161
    %355 = vmatprep.subr.mxu0 0.0
    %356 = vmatpush1.msra.mxu0 %v162
    %357 = vmatprep.subr.mxu0 0.0
    %358 = vmatpush1.msra.mxu0 %v163
    %359 = vmatprep.subr.mxu0 0.0
    %360 = vmatpush1.msra.mxu0 %v164
    %361 = vmatprep.subr.mxu0 0.0
    %362 = vmatpush1.msra.mxu0 %v165
    %363 = vmatprep.subr.mxu0 0.0
    %364 = vmatpush1.msra.mxu0 %v166
    %365 = vmatprep.mubr.f32.mxu0 %v98
    %366 = vmatmul.mubr.f32.gmra.mrb[0].mxu0 %v97
    %v367 = vpop.f32.mrb[0].mxu0
    %v368 = vadd.f32 %v298, %v367
    %v369 = vpop.f32.mrb[0].mxu0
    %370 = vdwg.mxu0
    %371 = vmatprep.subr.mxu0 0.0
    %372 = vmatpush1.msra.mxu0 %v167
    %373 = vmatprep.subr.mxu0 0.0
    %374 = vmatpush1.msra.mxu0 %v168
    %375 = vmatprep.subr.mxu0 0.0
    %376 = vmatpush1.msra.mxu0 %v169
    %377 = vmatprep.subr.mxu0 0.0
    %378 = vmatpush1.msra.mxu0 %v170
    %379 = vmatprep.subr.mxu0 0.0
    %380 = vmatpush1.msra.mxu0 %v171
    %381 = vmatprep.subr.mxu0 0.0
    %382 = vmatpush1.msra.mxu0 %v172
    %383 = vmatprep.subr.mxu0 0.0
    %384 = vmatpush1.msra.mxu0 %v173
    %385 = vmatprep.subr.mxu0 0.0
    %386 = vmatpush1.msra.mxu0 %v174
    %387 = vmatprep.subr.mxu0 0.0
    %388 = vmatpush1.msra.mxu0 %v175
    %389 = vmatprep.subr.mxu0 0.0
    %390 = vmatpush1.msra.mxu0 %v176
    %391 = vmatprep.subr.mxu0 0.0
    %392 = vmatpush1.msra.mxu0 %v177
    %393 = vmatprep.subr.mxu0 0.0
    %394 = vmatpush1.msra.mxu0 %v178
    %395 = vmatprep.subr.mxu0 0.0
    %396 = vmatpush1.msra.mxu0 %v179
    %397 = vmatprep.subr.mxu0 0.0
    %398 = vmatpush1.msra.mxu0 %v180
    %399 = vmatprep.subr.mxu0 0.0
    %400 = vmatpush1.msra.mxu0 %v181
    %401 = vmatprep.subr.mxu0 0.0
    %402 = vmatpush1.msra.mxu0 %v182
    %403 = vmatprep.subr.mxu0 0.0
    %404 = vmatpush1.msra.mxu0 %v183
    %405 = vmatprep.subr.mxu0 0.0
    %406 = vmatpush1.msra.mxu0 %v184
    %407 = vmatprep.subr.mxu0 0.0
    %408 = vmatpush1.msra.mxu0 %v185
    %409 = vmatprep.subr.mxu0 0.0
    %410 = vmatpush1.msra.mxu0 %v186
    %411 = vmatprep.subr.mxu0 0.0
    %412 = vmatpush1.msra.mxu0 %v187
    %413 = vmatprep.subr.mxu0 0.0
    %414 = vmatpush1.msra.mxu0 %v188
    %415 = vmatprep.subr.mxu0 0.0
    %416 = vmatpush1.msra.mxu0 %v189
    %417 = vmatprep.subr.mxu0 0.0
    %418 = vmatpush1.msra.mxu0 %v190
    %419 = vmatprep.subr.mxu0 0.0
    %420 = vmatpush1.msra.mxu0 %v191
    %421 = vmatprep.subr.mxu0 0.0
    %422 = vmatpush1.msra.mxu0 %v192
    %423 = vmatprep.subr.mxu0 0.0
    %424 = vmatpush1.msra.mxu0 %v193
    %425 = vmatprep.subr.mxu0 0.0
    %426 = vmatpush1.msra.mxu0 %v194
    %427 = vmatprep.subr.mxu0 0.0
    %428 = vmatpush1.msra.mxu0 %v195
    %429 = vmatprep.subr.mxu0 0.0
    %430 = vmatpush1.msra.mxu0 %v196
    %431 = vmatprep.subr.mxu0 0.0
    %432 = vmatpush1.msra.mxu0 %v197
    %433 = vmatprep.subr.mxu0 0.0
    %434 = vmatpush1.msra.mxu0 %v198
    %435 = vmatprep.mubr.f32.mxu0 %v100
    %436 = vmatmul.mubr.f32.gmra.mrb[0].mxu0 %v99
    %v437 = vpop.f32.mrb[0].mxu0
    %v438 = vadd.f32 %v368, %v437
    %v439 = vpop.f32.mrb[0].mxu0
    %440 = vdwg.mxu0
    %441 = vmatprep.subr.mxu0 0.0
    %442 = vmatpush1.msra.mxu0 %v199
    %443 = vmatprep.subr.mxu0 0.0
    %444 = vmatpush1.msra.mxu0 %v200
    %445 = vmatprep.subr.mxu0 0.0
    %446 = vmatpush1.msra.mxu0 %v201
    %447 = vmatprep.subr.mxu0 0.0
    %448 = vmatpush1.msra.mxu0 %v202
    %449 = vmatprep.subr.mxu0 0.0
    %450 = vmatpush1.msra.mxu0 %v203
    %451 = vmatprep.subr.mxu0 0.0
    %452 = vmatpush1.msra.mxu0 %v204
    %453 = vmatprep.subr.mxu0 0.0
    %454 = vmatpush1.msra.mxu0 %v205
    %455 = vmatprep.subr.mxu0 0.0
    %456 = vmatpush1.msra.mxu0 %v206
    %457 = vmatprep.subr.mxu0 0.0
    %458 = vmatpush1.msra.mxu0 %v207
    %459 = vmatprep.subr.mxu0 0.0
    %460 = vmatpush1.msra.mxu0 %v208
    %461 = vmatprep.subr.mxu0 0.0
    %462 = vmatpush1.msra.mxu0 %v209
    %463 = vmatprep.subr.mxu0 0.0
    %464 = vmatpush1.msra.mxu0 %v210
    %465 = vmatprep.subr.mxu0 0.0
    %466 = vmatpush1.msra.mxu0 %v211
    %467 = vmatprep.subr.mxu0 0.0
    %468 = vmatpush1.msra.mxu0 %v212
    %469 = vmatprep.subr.mxu0 0.0
    %470 = vmatpush1.msra.mxu0 %v213
    %471 = vmatprep.subr.mxu0 0.0
    %472 = vmatpush1.msra.mxu0 %v214
    %473 = vmatprep.subr.mxu0 0.0
    %474 = vmatpush1.msra.mxu0 %v215
    %475 = vmatprep.subr.mxu0 0.0
    %476 = vmatpush1.msra.mxu0 %v216
    %477 = vmatprep.subr.mxu0 0.0
    %478 = vmatpush1.msra.mxu0 %v217
    %479 = vmatprep.subr.mxu0 0.0
    %480 = vmatpush1.msra.mxu0 %v218
    %481 = vmatprep.subr.mxu0 0.0
    %482 = vmatpush1.msra.mxu0 %v219
    %483 = vmatprep.subr.mxu0 0.0
    %484 = vmatpush1.msra.mxu0 %v220
    %485 = vmatprep.subr.mxu0 0.0
    %486 = vmatpush1.msra.mxu0 %v221
    %487 = vmatprep.subr.mxu0 0.0
    %488 = vmatpush1.msra.mxu0 %v222
    %489 = vmatprep.subr.mxu0 0.0
    %490 = vmatpush1.msra.mxu0 %v223
    %491 = vmatprep.subr.mxu0 0.0
    %492 = vmatpush1.msra.mxu0 %v224
    %493 = vmatprep.subr.mxu0 0.0
    %494 = vmatpush1.msra.mxu0 %v225
    %495 = vmatprep.subr.mxu0 0.0
    %496 = vmatpush1.msra.mxu0 %v226
    %497 = vmatprep.subr.mxu0 0.0
    %498 = vmatpush1.msra.mxu0 %v227
    %499 = vmatprep.subr.mxu0 0.0
    %500 = vmatpush1.msra.mxu0 %v228
    %501 = vmatprep.subr.mxu0 0.0
    %502 = vmatpush1.msra.mxu0 %v229
    %503 = vmatprep.subr.mxu0 0.0
    %504 = vmatpush1.msra.mxu0 %v230
    %505 = vmatprep.mubr.f32.mxu0 %v102
    %506 = vmatmul.mubr.f32.gmra.mrb[0].mxu0 %v101
    %v507 = vpop.f32.mrb[0].mxu0
    %v508 = vadd.f32 %v438, %v507
    %v509 = vpop.f32.mrb[0].mxu0
    %510 = vdwg.mxu0
    %v511 = vpack.c.bf16 %v508, %v508
    %v512 = vld [vmem:[#allocation5] sm:$0xff]
    %v513 = vld [vmem:[#allocation5 + $0x8] sm:$0xff]
    %v514 = vld [vmem:[#allocation5 + $0x10] sm:$0xff]
    %v515 = vld [vmem:[#allocation5 + $0x18] sm:$0xff]
    %v516 = vld [vmem:[#allocation5 + $0x20] sm:$0xff]
    %v517 = vld [vmem:[#allocation5 + $0x28] sm:$0xff]
    %v518 = vld [vmem:[#allocation5 + $0x30] sm:$0xff]
    %v519 = vld [vmem:[#allocation5 + $0x38] sm:$0xff]
    %v520 = vld [vmem:[#allocation5 + $0x40] sm:$0xff]
    %v521 = vld [vmem:[#allocation5 + $0x48] sm:$0xff]
    %v522 = vld [vmem:[#allocation5 + $0x50] sm:$0xff]
    %v523 = vld [vmem:[#allocation5 + $0x58] sm:$0xff]
    %v524 = vld [vmem:[#allocation5 + $0x60] sm:$0xff]
    %v525 = vld [vmem:[#allocation5 + $0x68] sm:$0xff]
    %v526 = vld [vmem:[#allocation5 + $0x70] sm:$0xff]
    %v527 = vld [vmem:[#allocation5 + $0x78] sm:$0xff]
    %v528 = vld [vmem:[%s3] sm:$0x3]
    %v530 = vlaneseq
    %v531 = vshrl.u32 %v530, 7
    %v532 = vsub.s32 0, %v531
    %v533 = vrot.slane %v528, %v532
    %v534 = vlaneseq
    %v535 = vshrl.u32 %v534, 7
    %v536 = vsub.s32 1, %v535
    %v537 = vrot.slane %v528, %v536
    %v556 = vunpack.c.l.b16 %v512
    %v557 = vunpack.c.h.b16 %v512
    %v558 = vunpack.c.l.b16 %v513
    %v559 = vunpack.c.h.b16 %v513
    %v560 = vunpack.c.l.b16 %v514
    %v561 = vunpack.c.h.b16 %v514
    %v562 = vunpack.c.l.b16 %v515
    %v563 = vunpack.c.h.b16 %v515
    %v564 = vunpack.c.l.b16 %v516
    %v565 = vunpack.c.h.b16 %v516
    %v566 = vunpack.c.l.b16 %v517
    %v567 = vunpack.c.h.b16 %v517
    %v568 = vunpack.c.l.b16 %v518
    %v569 = vunpack.c.h.b16 %v518
    %v570 = vunpack.c.l.b16 %v519
    %v571 = vunpack.c.h.b16 %v519
    %v572 = vunpack.c.l.b16 %v520
    %v573 = vunpack.c.h.b16 %v520
    %v574 = vunpack.c.l.b16 %v521
    %v575 = vunpack.c.h.b16 %v521
    %v576 = vunpack.c.l.b16 %v522
    %v577 = vunpack.c.h.b16 %v522
    %v578 = vunpack.c.l.b16 %v523
    %v579 = vunpack.c.h.b16 %v523
    %v580 = vunpack.c.l.b16 %v524
    %v581 = vunpack.c.h.b16 %v524
    %v582 = vunpack.c.l.b16 %v525
    %v583 = vunpack.c.h.b16 %v525
    %v584 = vunpack.c.l.b16 %v526
    %v585 = vunpack.c.h.b16 %v526
    %v586 = vunpack.c.l.b16 %v527
    %v587 = vunpack.c.h.b16 %v527
    %v588 = vpack.c.b16 %v558, %v556
    %v589 = vpack.c.b16 %v559, %v557
    %v590 = vpack.c.b16 %v562, %v560
    %v591 = vpack.c.b16 %v563, %v561
    %v592 = vpack.c.b16 %v566, %v564
    %v593 = vpack.c.b16 %v567, %v565
    %v594 = vpack.c.b16 %v570, %v568
    %v595 = vpack.c.b16 %v571, %v569
    %v596 = vpack.c.b16 %v574, %v572
    %v597 = vpack.c.b16 %v575, %v573
    %v598 = vpack.c.b16 %v578, %v576
    %v599 = vpack.c.b16 %v579, %v577
    %v600 = vpack.c.b16 %v582, %v580
    %v601 = vpack.c.b16 %v583, %v581
    %v602 = vpack.c.b16 %v586, %v584
    %v603 = vpack.c.b16 %v587, %v585
    %620 = vmatprep.subr.bf16.mxu0 %v589
    %621 = vmatpush1.bf16.msra.mxu0 %v588
    %622 = vmatprep.subr.bf16.mxu0 %v591
    %623 = vmatpush1.bf16.msra.mxu0 %v590
    %624 = vmatprep.subr.bf16.mxu0 %v593
    %625 = vmatpush1.bf16.msra.mxu0 %v592
    %626 = vmatprep.subr.bf16.mxu0 %v595
    %627 = vmatpush1.bf16.msra.mxu0 %v594
    %628 = vmatprep.subr.bf16.mxu0 %v597
    %629 = vmatpush1.bf16.msra.mxu0 %v596
    %630 = vmatprep.subr.bf16.mxu0 %v599
    %631 = vmatpush1.bf16.msra.mxu0 %v598
    %632 = vmatprep.subr.bf16.mxu0 %v601
    %633 = vmatpush1.bf16.msra.mxu0 %v600
    %634 = vmatprep.subr.bf16.mxu0 %v603
    %635 = vmatpush1.bf16.msra.mxu0 %v602
    %636 = vmatprep.subr.bf16.mxu0 0
    %637 = vmatpush1.bf16.msra.mxu0 0
    %638 = vmatprep.subr.bf16.mxu0 0
    %639 = vmatpush1.bf16.msra.mxu0 0
    %640 = vmatprep.subr.bf16.mxu0 0
    %641 = vmatpush1.bf16.msra.mxu0 0
    %642 = vmatprep.subr.bf16.mxu0 0
    %643 = vmatpush1.bf16.msra.mxu0 0
    %644 = vmatprep.subr.bf16.mxu0 0
    %645 = vmatpush1.bf16.msra.mxu0 0
    %646 = vmatprep.subr.bf16.mxu0 0
    %647 = vmatpush1.bf16.msra.mxu0 0
    %648 = vmatprep.subr.bf16.mxu0 0
    %649 = vmatpush1.bf16.msra.mxu0 0
    %650 = vmatprep.subr.bf16.mxu0 0
    %651 = vmatpush1.bf16.msra.mxu0 0
    %652 = vmatprep.mubr.bf16.mxu0 0
    %653 = vmatmul.mubr.bf16.gmra.mrb[0].mxu0 %v511
    %v654 = vpop.f32.mrb[0].mxu0
    %v655 = vadd.f32 %v533, %v654
    %v656 = vpop.f32.mrb[0].mxu0
    %v657 = vadd.f32 %v537, %v656
    %v658 = vpop.f32.mrb[0].mxu0
    %v659 = vpop.f32.mrb[0].mxu0
    %660 = vdwg.mxu0
    %v661 = vmul.f32 %v655, 0.5
    %v662 = vmul.f32 %v657, 0.5
    %v663 = vtanh.pop %v661
    %v664 = vtanh.pop %v662
    %v665 = vadd.f32 %v663, 1.0
    %v666 = vadd.f32 %v664, 1.0
    %v667 = vmul.f32 %v665, 0.5
    %v668 = vmul.f32 %v666, 0.5
    %v669 = vmul.f32 %v655, %v667
    %v670 = vmul.f32 %v657, %v668
    %v671 = vpack.c.bf16 %v669, %v669
    %v672 = vpack.c.bf16 %v670, %v670
    %v673 = vld [vmem:[#allocation7] sm:$0xff]
    %v674 = vld [vmem:[#allocation7 + $0x8] sm:$0xff]
    %v675 = vld [vmem:[#allocation7 + $0x10] sm:$0xff]
    %v676 = vld [vmem:[#allocation7 + $0x18] sm:$0xff]
    %v677 = vld [vmem:[#allocation7 + $0x20] sm:$0xff]
    %v678 = vld [vmem:[#allocation7 + $0x28] sm:$0xff]
    %v679 = vld [vmem:[#allocation7 + $0x30] sm:$0xff]
    %v680 = vld [vmem:[#allocation7 + $0x38] sm:$0xff]
    %v681 = vld [vmem:[#allocation7 + $0x40] sm:$0xff]
    %v682 = vld [vmem:[#allocation7 + $0x48] sm:$0xff]
    %v683 = vld [vmem:[#allocation7 + $0x50] sm:$0xff]
    %v684 = vld [vmem:[#allocation7 + $0x58] sm:$0xff]
    %v685 = vld [vmem:[#allocation7 + $0x60] sm:$0xff]
    %v686 = vld [vmem:[#allocation7 + $0x68] sm:$0xff]
    %v687 = vld [vmem:[#allocation7 + $0x70] sm:$0xff]
    %v688 = vld [vmem:[#allocation7 + $0x78] sm:$0xff]
    %v689 = vld [vmem:[#allocation7 + $0x80] sm:$0xff]
    %v690 = vld [vmem:[#allocation7 + $0x88] sm:$0xff]
    %v691 = vld [vmem:[#allocation7 + $0x90] sm:$0xff]
    %v692 = vld [vmem:[#allocation7 + $0x98] sm:$0xff]
    %v693 = vld [vmem:[#allocation7 + $0xa0] sm:$0xff]
    %v694 = vld [vmem:[#allocation7 + $0xa8] sm:$0xff]
    %v695 = vld [vmem:[#allocation7 + $0xb0] sm:$0xff]
    %v696 = vld [vmem:[#allocation7 + $0xb8] sm:$0xff]
    %v697 = vld [vmem:[#allocation7 + $0xc0] sm:$0xff]
    %v698 = vld [vmem:[#allocation7 + $0xc8] sm:$0xff]
    %v699 = vld [vmem:[#allocation7 + $0xd0] sm:$0xff]
    %v700 = vld [vmem:[#allocation7 + $0xd8] sm:$0xff]
    %v701 = vld [vmem:[#allocation7 + $0xe0] sm:$0xff]
    %v702 = vld [vmem:[#allocation7 + $0xe8] sm:$0xff]
    %v703 = vld [vmem:[#allocation7 + $0xf0] sm:$0xff]
    %v704 = vld [vmem:[#allocation7 + $0xf8] sm:$0xff]
    %v705 = vld [vmem:[%s5] sm:$0x3]
    %v707 = vlaneseq
    %v708 = vshrl.u32 %v707, 7
    %v709 = vsub.s32 0, %v708
    %v710 = vrot.slane %v705, %v709
    %v711 = vlaneseq
    %v712 = vshrl.u32 %v711, 7
    %v713 = vsub.s32 1, %v712
    %v714 = vrot.slane %v705, %v713
    %v749 = vunpack.c.l.b16 %v673
    %v750 = vunpack.c.h.b16 %v673
    %v751 = vunpack.c.l.b16 %v674
    %v752 = vunpack.c.h.b16 %v674
    %v753 = vunpack.c.l.b16 %v675
    %v754 = vunpack.c.h.b16 %v675
    %v755 = vunpack.c.l.b16 %v676
    %v756 = vunpack.c.h.b16 %v676
    %v757 = vunpack.c.l.b16 %v677
    %v758 = vunpack.c.h.b16 %v677
    %v759 = vunpack.c.l.b16 %v678
    %v760 = vunpack.c.h.b16 %v678
    %v761 = vunpack.c.l.b16 %v679
    %v762 = vunpack.c.h.b16 %v679
    %v763 = vunpack.c.l.b16 %v680
    %v764 = vunpack.c.h.b16 %v680
    %v765 = vunpack.c.l.b16 %v681
    %v766 = vunpack.c.h.b16 %v681
    %v767 = vunpack.c.l.b16 %v682
    %v768 = vunpack.c.h.b16 %v682
    %v769 = vunpack.c.l.b16 %v683
    %v770 = vunpack.c.h.b16 %v683
    %v771 = vunpack.c.l.b16 %v684
    %v772 = vunpack.c.h.b16 %v684
    %v773 = vunpack.c.l.b16 %v685
    %v774 = vunpack.c.h.b16 %v685
    %v775 = vunpack.c.l.b16 %v686
    %v776 = vunpack.c.h.b16 %v686
    %v777 = vunpack.c.l.b16 %v687
    %v778 = vunpack.c.h.b16 %v687
    %v779 = vunpack.c.l.b16 %v688
    %v780 = vunpack.c.h.b16 %v688
    %v781 = vunpack.c.l.b16 %v689
    %v782 = vunpack.c.h.b16 %v689
    %v783 = vunpack.c.l.b16 %v690
    %v784 = vunpack.c.h.b16 %v690
    %v785 = vunpack.c.l.b16 %v691
    %v786 = vunpack.c.h.b16 %v691
    %v787 = vunpack.c.l.b16 %v692
    %v788 = vunpack.c.h.b16 %v692
    %v789 = vunpack.c.l.b16 %v693
    %v790 = vunpack.c.h.b16 %v693
    %v791 = vunpack.c.l.b16 %v694
    %v792 = vunpack.c.h.b16 %v694
    %v793 = vunpack.c.l.b16 %v695
    %v794 = vunpack.c.h.b16 %v695
    %v795 = vunpack.c.l.b16 %v696
    %v796 = vunpack.c.h.b16 %v696
    %v797 = vunpack.c.l.b16 %v697
    %v798 = vunpack.c.h.b16 %v697
    %v799 = vunpack.c.l.b16 %v698
    %v800 = vunpack.c.h.b16 %v698
    %v801 = vunpack.c.l.b16 %v699
    %v802 = vunpack.c.h.b16 %v699
    %v803 = vunpack.c.l.b16 %v700
    %v804 = vunpack.c.h.b16 %v700
    %v805 = vunpack.c.l.b16 %v701
    %v806 = vunpack.c.h.b16 %v701
    %v807 = vunpack.c.l.b16 %v702
    %v808 = vunpack.c.h.b16 %v702
    %v809 = vunpack.c.l.b16 %v703
    %v810 = vunpack.c.h.b16 %v703
    %v811 = vunpack.c.l.b16 %v704
    %v812 = vunpack.c.h.b16 %v704
    %v813 = vpack.c.b16 %v751, %v749
    %v814 = vpack.c.b16 %v752, %v750
    %v815 = vpack.c.b16 %v755, %v753
    %v816 = vpack.c.b16 %v756, %v754
    %v817 = vpack.c.b16 %v759, %v757
    %v818 = vpack.c.b16 %v760, %v758
    %v819 = vpack.c.b16 %v763, %v761
    %v820 = vpack.c.b16 %v764, %v762
    %v821 = vpack.c.b16 %v767, %v765
    %v822 = vpack.c.b16 %v768, %v766
    %v823 = vpack.c.b16 %v771, %v769
    %v824 = vpack.c.b16 %v772, %v770
    %v825 = vpack.c.b16 %v775, %v773
    %v826 = vpack.c.b16 %v776, %v774
    %v827 = vpack.c.b16 %v779, %v777
    %v828 = vpack.c.b16 %v780, %v778
    %v829 = vpack.c.b16 %v783, %v781
    %v830 = vpack.c.b16 %v784, %v782
    %v831 = vpack.c.b16 %v787, %v785
    %v832 = vpack.c.b16 %v788, %v786
    %v833 = vpack.c.b16 %v791, %v789
    %v834 = vpack.c.b16 %v792, %v790
    %v835 = vpack.c.b16 %v795, %v793
    %v836 = vpack.c.b16 %v796, %v794
    %v837 = vpack.c.b16 %v799, %v797
    %v838 = vpack.c.b16 %v800, %v798
    %v839 = vpack.c.b16 %v803, %v801
    %v840 = vpack.c.b16 %v804, %v802
    %v841 = vpack.c.b16 %v807, %v805
    %v842 = vpack.c.b16 %v808, %v806
    %v843 = vpack.c.b16 %v811, %v809
    %v844 = vpack.c.b16 %v812, %v810
    %877 = vmatprep.subr.bf16.mxu0 %v814
    %878 = vmatpush1.bf16.msra.mxu0 %v813
    %879 = vmatprep.subr.bf16.mxu0 %v816
    %880 = vmatpush1.bf16.msra.mxu0 %v815
    %881 = vmatprep.subr.bf16.mxu0 %v818
    %882 = vmatpush1.bf16.msra.mxu0 %v817
    %883 = vmatprep.subr.bf16.mxu0 %v820
    %884 = vmatpush1.bf16.msra.mxu0 %v819
    %885 = vmatprep.subr.bf16.mxu0 %v822
    %886 = vmatpush1.bf16.msra.mxu0 %v821
    %887 = vmatprep.subr.bf16.mxu0 %v824
    %888 = vmatpush1.bf16.msra.mxu0 %v823
    %889 = vmatprep.subr.bf16.mxu0 %v826
    %890 = vmatpush1.bf16.msra.mxu0 %v825
    %891 = vmatprep.subr.bf16.mxu0 %v828
    %892 = vmatpush1.bf16.msra.mxu0 %v827
    %893 = vmatprep.subr.bf16.mxu0 %v830
    %894 = vmatpush1.bf16.msra.mxu0 %v829
    %895 = vmatprep.subr.bf16.mxu0 %v832
    %896 = vmatpush1.bf16.msra.mxu0 %v831
    %897 = vmatprep.subr.bf16.mxu0 %v834
    %898 = vmatpush1.bf16.msra.mxu0 %v833
    %899 = vmatprep.subr.bf16.mxu0 %v836
    %900 = vmatpush1.bf16.msra.mxu0 %v835
    %901 = vmatprep.subr.bf16.mxu0 %v838
    %902 = vmatpush1.bf16.msra.mxu0 %v837
    %903 = vmatprep.subr.bf16.mxu0 %v840
    %904 = vmatpush1.bf16.msra.mxu0 %v839
    %905 = vmatprep.subr.bf16.mxu0 %v842
    %906 = vmatpush1.bf16.msra.mxu0 %v841
    %907 = vmatprep.subr.bf16.mxu0 %v844
    %908 = vmatpush1.bf16.msra.mxu0 %v843
    %909 = vmatprep.mubr.bf16.mxu0 %v672
    %910 = vmatmul.mubr.bf16.gmra.mrb[0].mxu0 %v671
    %v911 = vpop.f32.mrb[0].mxu0
    %v912 = vadd.f32 %v710, %v911
    %v913 = vpop.f32.mrb[0].mxu0
    %v914 = vadd.f32 %v714, %v913
    %v915 = vpop.f32.mrb[0].mxu0
    %v916 = vpop.f32.mrb[0].mxu0
    %917 = vdwg.mxu0
    %v918 = vpack.c.bf16 %v912, %v912
    %v919 = vpack.c.bf16 %v914, %v914
    %v922 = vunpack.c.l.b16 %v918
    %v923 = vunpack.c.l.b16 %v919
    %v924 = vpack.c.b16 %v923, %v922
    %926 = vst [vmem:[#allocation8] sm:$0xff] %v924
    // Predicated region
    $region38: #{tpu_custom_call.1} parent=1 // pred_check
      _
    $region39: #{tpu_custom_call.1} parent=1 // pred_check_branch
      %928 = sbr.rel (0) target = $region41
    $region40: #{tpu_custom_call.1} parent=1 // pred_region
      %s930 = ssub.s32 128, 128
      %931 = vsyncadd [#allocation4], %s930
      %s933 = sshll.u32 [#allocation8], 4
      %s934 = int_to_ptr.vmem [resolvable:$true] %s933
      %936 = dma.vmem_to_hbm [thread:$0]  %s934, 128, %s6, [#allocation4]
    $region41: #{tpu_custom_call.1} parent=1 // pred_fallthru
      _
    // Predicated region
    $region42: #{tpu_custom_call.1} parent=1 // pred_check
      _
    $region43: #{tpu_custom_call.1} parent=1 // pred_check_branch
      %938 = sbr.rel (0) target = $region45
    $region44: #{tpu_custom_call.1} parent=1 // pred_region
      %939 = dma.done [#allocation4], 128
    $region45: #{tpu_custom_call.1} parent=1 // pred_fallthru
      _
    %940 = vsyncpa [#allocation3], 1
    %941 = vsyncpa [#allocation6], 1
    %942 = vsyncpa [#allocation4], 1

// kernel: tpu_custom_call.1
$region0: #{tpu_custom_call.1}
  #allocation0 [shape = 'u32[]', space=smem, size = 0x4, offset = 0x4, fixed_abs, tag = 'smem constant byte address 0x4 - core index']
  #allocation1 [shape = 'u32[144,128]{1,0:T(1,128)}', space=vmem, size = 0x12000, scoped, tag = 'internal scratch']
  %s0 = inlined_call_operand.vmem [shape: s32[8,1], index: 0, kind: input, shape index: {}]
  %s1 = inlined_call_operand.hbm [shape: f32[1024,128], index: 1, kind: input, shape index: {}]
  %s2 = inlined_call_operand.hbm [shape: bf16[128,256], index: 2, kind: input, shape index: {}]
  %s3 = inlined_call_operand.vmem [shape: f32[1,256], index: 3, kind: input, shape index: {}]
  %s4 = inlined_call_operand.hbm [shape: bf16[256,256], index: 4, kind: input, shape index: {}]
  %s5 = inlined_call_operand.vmem [shape: f32[1,256], index: 5, kind: input, shape index: {}]
  %s6 = inlined_call_operand.hbm [shape: bf16[8,256], index: 6, kind: output, shape index: {}]
  %s7 = sld [smem:[#allocation0]]
  $region46: #{tpu_custom_call.1} parent=0
    _
  %s9 = ssub.s32 1, %s7
  %s10 = scalar_select 0, %s9, %s7
  $region1: #{tpu_custom_call.1} parent=0
    #allocation2 [shape = 'u8[524288]{0}', space=vmem, size = 0x80000, scoped, tag = 'input window, operand 1, single buffered']
    #allocation3 [shape = 's32[1]{0}', space=sflag, size = 0x4, scoped, tag = 'scoped memory for tpu_custom_call.1']
    #allocation4 [shape = 's32[1]{0}', space=sflag, size = 0x4, scoped, tag = 'scoped memory for tpu_custom_call.1']
    #allocation5 [shape = 'u8[65536]{0}', space=vmem, size = 0x10000, scoped, tag = 'input window, operand 2, single buffered']
    #allocation6 [shape = 's32[1]{0}', space=sflag, size = 0x4, scoped, tag = 'scoped memory for tpu_custom_call.1']
    #allocation7 [shape = 'u8[131072]{0}', space=vmem, size = 0x20000, scoped, tag = 'input window, operand 4, single buffered']
    #allocation8 [shape = 'u8[4096]{0}', space=vmem, size = 0x1000, scoped, tag = 'output window, operand 0, single buffered']
    %11 = vsyncpa [#allocation3], 0
    %12 = vsyncpa [#allocation6], 0
    %13 = vsyncpa [#allocation4], 0
    // Predicated region
    $region2: #{tpu_custom_call.1} parent=1 // pred_check
      _
    $region3: #{tpu_custom_call.1} parent=1 // pred_check_branch
      %15 = sbr.rel (0) target = $region5
    $region4: #{tpu_custom_call.1} parent=1 // pred_region
      _
    $region5: #{tpu_custom_call.1} parent=1 // pred_fallthru
      _
    // Predicated region
    $region6: #{tpu_custom_call.1} parent=1 // pred_check
      _
    $region7: #{tpu_custom_call.1} parent=1 // pred_check_branch
      %17 = sbr.rel (0) target = $region9
    $region8: #{tpu_custom_call.1} parent=1 // pred_region
      %s19 = ssub.s32 16384, 16384
      %20 = vsyncadd [#allocation3], %s19
      %s21 = sshll.u32 [#allocation2], 4
      %s22 = int_to_ptr.vmem [resolvable:$true] %s21
      %27 = dma.hbm_to_vmem [thread:$0]  %s1, 16384, %s22, [#allocation3], 128, 128, 8
    $region9: #{tpu_custom_call.1} parent=1 // pred_fallthru
      _
    // Predicated region
    $region10: #{tpu_custom_call.1} parent=1 // pred_check
      _
    $region11: #{tpu_custom_call.1} parent=1 // pred_check_branch
      %29 = sbr.rel (0) target = $region13
    $region12: #{tpu_custom_call.1} parent=1 // pred_region
      %s31 = ssub.s32 2048, 2048
      %32 = vsyncadd [#allocation6], %s31
      %s33 = sshll.u32 [#allocation5], 4
      %s34 = int_to_ptr.vmem [resolvable:$true] %s33
      %39 = dma.hbm_to_vmem [thread:$0]  %s2, 2048, %s34, [#allocation6], 128, 128, 8
    $region13: #{tpu_custom_call.1} parent=1 // pred_fallthru
      _
    // Predicated region
    $region14: #{tpu_custom_call.1} parent=1 // pred_check
      _
    $region15: #{tpu_custom_call.1} parent=1 // pred_check_branch
      %41 = sbr.rel (0) target = $region17
    $region16: #{tpu_custom_call.1} parent=1 // pred_region
      _
    $region17: #{tpu_custom_call.1} parent=1 // pred_fallthru
      _
    // Predicated region
    $region18: #{tpu_custom_call.1} parent=1 // pred_check
      _
    $region19: #{tpu_custom_call.1} parent=1 // pred_check_branch
      %43 = sbr.rel (0) target = $region21
    $region20: #{tpu_custom_call.1} parent=1 // pred_region
      %s45 = ssub.s32 4096, 4096
      %46 = vsyncadd [#allocation6], %s45
      %s47 = sshll.u32 [#allocation7], 4
      %s48 = int_to_ptr.vmem [resolvable:$true] %s47
      %53 = dma.hbm_to_vmem [thread:$0]  %s4, 4096, %s48, [#allocation6], 128, 128, 8
    $region21: #{tpu_custom_call.1} parent=1 // pred_fallthru
      _
    // Predicated region
    $region22: #{tpu_custom_call.1} parent=1 // pred_check
      _
    $region23: #{tpu_custom_call.1} parent=1 // pred_check_branch
      %55 = sbr.rel (0) target = $region25
    $region24: #{tpu_custom_call.1} parent=1 // pred_region
      _
    $region25: #{tpu_custom_call.1} parent=1 // pred_fallthru
      _
    // Predicated region
    $region26: #{tpu_custom_call.1} parent=1 // pred_check
      _
    $region27: #{tpu_custom_call.1} parent=1 // pred_check_branch
      %57 = sbr.rel (0) target = $region29
    $region28: #{tpu_custom_call.1} parent=1 // pred_region
      %58 = dma.done [#allocation3], 16384
    $region29: #{tpu_custom_call.1} parent=1 // pred_fallthru
      _
    // Predicated region
    $region30: #{tpu_custom_call.1} parent=1 // pred_check
      _
    $region31: #{tpu_custom_call.1} parent=1 // pred_check_branch
      %60 = sbr.rel (0) target = $region33
    $region32: #{tpu_custom_call.1} parent=1 // pred_region
      %61 = dma.done [#allocation6], 2048
    $region33: #{tpu_custom_call.1} parent=1 // pred_fallthru
      _
    // Predicated region
    $region34: #{tpu_custom_call.1} parent=1 // pred_check
      _
    $region35: #{tpu_custom_call.1} parent=1 // pred_check_branch
      %63 = sbr.rel (0) target = $region37
    $region36: #{tpu_custom_call.1} parent=1 // pred_region
      %64 = dma.done [#allocation6], 4096
    $region37: #{tpu_custom_call.1} parent=1 // pred_fallthru
      _
    %v66 = vld [vmem:[%s0] sm:$0xff]
    %v67 = vlaneseq
    %v68 = vand.u32 %v67, 127
    %v69 = vadd.s32 %v68, 128
    %v70 = vadd.s32 %v68, 256
    %v71 = vadd.s32 %v68, 384
    %v72 = vadd.s32 %v68, 512
    %v73 = vadd.s32 %v68, 640
    %v74 = vadd.s32 %v68, 768
    %v75 = vadd.s32 %v68, 896
    %76 = vset.pattern.permute.xlu0 0
    %77 = vperm.xlu0 %76, %v66
    %v78 = vpop.permute.xlu0 %77
    %vm79 = vcmp.eq.s32.totalorder %v68, %v78
    %vm80 = vcmp.eq.s32.totalorder %v69, %v78
    %vm81 = vcmp.eq.s32.totalorder %v70, %v78
    %vm82 = vcmp.eq.s32.totalorder %v71, %v78
    %vm83 = vcmp.eq.s32.totalorder %v72, %v78
    %vm84 = vcmp.eq.s32.totalorder %v73, %v78
    %vm85 = vcmp.eq.s32.totalorder %v74, %v78
    %vm86 = vcmp.eq.s32.totalorder %v75, %v78
    %v87 = vsel %vm79, 1, 0
    %v88 = vsel %vm80, 1, 0
    %v89 = vsel %vm81, 1, 0
    %v90 = vsel %vm82, 1, 0
    %v91 = vsel %vm83, 1, 0
    %v92 = vsel %vm84, 1, 0
    %v93 = vsel %vm85, 1, 0
    %v94 = vsel %vm86, 1, 0
    %v95 = vcvt.s32.f32 %v87
    %v96 = vcvt.s32.f32 %v88
    %v97 = vcvt.s32.f32 %v89
    %v98 = vcvt.s32.f32 %v90
    %v99 = vcvt.s32.f32 %v91
    %v100 = vcvt.s32.f32 %v92
    %v101 = vcvt.s32.f32 %v93
    %v102 = vcvt.s32.f32 %v94
    %v103 = vld [vmem:[#allocation2] sm:$0xff]
    %v104 = vld [vmem:[#allocation2 + $0x8] sm:$0xff]
    %v105 = vld [vmem:[#allocation2 + $0x10] sm:$0xff]
    %v106 = vld [vmem:[#allocation2 + $0x18] sm:$0xff]
    %v107 = vld [vmem:[#allocation2 + $0x20] sm:$0xff]
    %v108 = vld [vmem:[#allocation2 + $0x28] sm:$0xff]
    %v109 = vld [vmem:[#allocation2 + $0x30] sm:$0xff]
    %v110 = vld [vmem:[#allocation2 + $0x38] sm:$0xff]
    %v111 = vld [vmem:[#allocation2 + $0x40] sm:$0xff]
    %v112 = vld [vmem:[#allocation2 + $0x48] sm:$0xff]
    %v113 = vld [vmem:[#allocation2 + $0x50] sm:$0xff]
    %v114 = vld [vmem:[#allocation2 + $0x58] sm:$0xff]
    %v115 = vld [vmem:[#allocation2 + $0x60] sm:$0xff]
    %v116 = vld [vmem:[#allocation2 + $0x68] sm:$0xff]
    %v117 = vld [vmem:[#allocation2 + $0x70] sm:$0xff]
    %v118 = vld [vmem:[#allocation2 + $0x78] sm:$0xff]
    %v119 = vld [vmem:[#allocation2 + $0x80] sm:$0xff]
    %v120 = vld [vmem:[#allocation2 + $0x88] sm:$0xff]
    %v121 = vld [vmem:[#allocation2 + $0x90] sm:$0xff]
    %v122 = vld [vmem:[#allocation2 + $0x98] sm:$0xff]
    %v123 = vld [vmem:[#allocation2 + $0xa0] sm:$0xff]
    %v124 = vld [vmem:[#allocation2 + $0xa8] sm:$0xff]
    %v125 = vld [vmem:[#allocation2 + $0xb0] sm:$0xff]
    %v126 = vld [vmem:[#allocation2 + $0xb8] sm:$0xff]
    %v127 = vld [vmem:[#allocation2 + $0xc0] sm:$0xff]
    %v128 = vld [vmem:[#allocation2 + $0xc8] sm:$0xff]
    %v129 = vld [vmem:[#allocation2 + $0xd0] sm:$0xff]
    %v130 = vld [vmem:[#allocation2 + $0xd8] sm:$0xff]
    %v131 = vld [vmem:[#allocation2 + $0xe0] sm:$0xff]
    %v132 = vld [vmem:[#allocation2 + $0xe8] sm:$0xff]
    %v133 = vld [vmem:[#allocation2 + $0xf0] sm:$0xff]
    %v134 = vld [vmem:[#allocation2 + $0xf8] sm:$0xff]
    %v135 = vld [vmem:[#allocation2 + $0x100] sm:$0xff]
    %v136 = vld [vmem:[#allocation2 + $0x108] sm:$0xff]
    %v137 = vld [vmem:[#allocation2 + $0x110] sm:$0xff]
    %v138 = vld [vmem:[#allocation2 + $0x118] sm:$0xff]
    %v139 = vld [vmem:[#allocation2 + $0x120] sm:$0xff]
    %v140 = vld [vmem:[#allocation2 + $0x128] sm:$0xff]
    %v141 = vld [vmem:[#allocation2 + $0x130] sm:$0xff]
    %v142 = vld [vmem:[#allocation2 + $0x138] sm:$0xff]
    %v143 = vld [vmem:[#allocation2 + $0x140] sm:$0xff]
    %v144 = vld [vmem:[#allocation2 + $0x148] sm:$0xff]
    %v145 = vld [vmem:[#allocation2 + $0x150] sm:$0xff]
    %v146 = vld [vmem:[#allocation2 + $0x158] sm:$0xff]
    %v147 = vld [vmem:[#allocation2 + $0x160] sm:$0xff]
    %v148 = vld [vmem:[#allocation2 + $0x168] sm:$0xff]
    %v149 = vld [vmem:[#allocation2 + $0x170] sm:$0xff]
    %v150 = vld [vmem:[#allocation2 + $0x178] sm:$0xff]
    %v151 = vld [vmem:[#allocation2 + $0x180] sm:$0xff]
    %v152 = vld [vmem:[#allocation2 + $0x188] sm:$0xff]
    %v153 = vld [vmem:[#allocation2 + $0x190] sm:$0xff]
    %v154 = vld [vmem:[#allocation2 + $0x198] sm:$0xff]
    %v155 = vld [vmem:[#allocation2 + $0x1a0] sm:$0xff]
    %v156 = vld [vmem:[#allocation2 + $0x1a8] sm:$0xff]
    %v157 = vld [vmem:[#allocation2 + $0x1b0] sm:$0xff]
    %v158 = vld [vmem:[#allocation2 + $0x1b8] sm:$0xff]
    %v159 = vld [vmem:[#allocation2 + $0x1c0] sm:$0xff]
    %v160 = vld [vmem:[#allocation2 + $0x1c8] sm:$0xff]
    %v161 = vld [vmem:[#allocation2 + $0x1d0] sm:$0xff]
    %v162 = vld [vmem:[#allocation2 + $0x1d8] sm:$0xff]
    %v163 = vld [vmem:[#allocation2 + $0x1e0] sm:$0xff]
    %v164 = vld [vmem:[#allocation2 + $0x1e8] sm:$0xff]
    %v165 = vld [vmem:[#allocation2 + $0x1f0] sm:$0xff]
    %v166 = vld [vmem:[#allocation2 + $0x1f8] sm:$0xff]
    %v167 = vld [vmem:[#allocation2 + $0x200] sm:$0xff]
    %v168 = vld [vmem:[#allocation2 + $0x208] sm:$0xff]
    %v169 = vld [vmem:[#allocation2 + $0x210] sm:$0xff]
    %v170 = vld [vmem:[#allocation2 + $0x218] sm:$0xff]
    %v171 = vld [vmem:[#allocation2 + $0x220] sm:$0xff]
    %v172 = vld [vmem:[#allocation2 + $0x228] sm:$0xff]
    %v173 = vld [vmem:[#allocation2 + $0x230] sm:$0xff]
    %v174 = vld [vmem:[#allocation2 + $0x238] sm:$0xff]
    %v175 = vld [vmem:[#allocation2 + $0x240] sm:$0xff]
    %v176 = vld [vmem:[#allocation2 + $0x248] sm:$0xff]
    %v177 = vld [vmem:[#allocation2 + $0x250] sm:$0xff]
    %v178 = vld [vmem:[#allocation2 + $0x258] sm:$0xff]
    %v179 = vld [vmem:[#allocation2 + $0x260] sm:$0xff]
    %v180 = vld [vmem:[#allocation2 + $0x268] sm:$0xff]
    %v181 = vld [vmem:[#allocation2 + $0x270] sm:$0xff]
    %v182 = vld [vmem:[#allocation2 + $0x278] sm:$0xff]
    %v183 = vld [vmem:[#allocation2 + $0x280] sm:$0xff]
    %v184 = vld [vmem:[#allocation2 + $0x288] sm:$0xff]
    %v185 = vld [vmem:[#allocation2 + $0x290] sm:$0xff]
    %v186 = vld [vmem:[#allocation2 + $0x298] sm:$0xff]
    %v187 = vld [vmem:[#allocation2 + $0x2a0] sm:$0xff]
    %v188 = vld [vmem:[#allocation2 + $0x2a8] sm:$0xff]
    %v189 = vld [vmem:[#allocation2 + $0x2b0] sm:$0xff]
    %v190 = vld [vmem:[#allocation2 + $0x2b8] sm:$0xff]
    %v191 = vld [vmem:[#allocation2 + $0x2c0] sm:$0xff]
    %v192 = vld [vmem:[#allocation2 + $0x2c8] sm:$0xff]
    %v193 = vld [vmem:[#allocation2 + $0x2d0] sm:$0xff]
    %v194 = vld [vmem:[#allocation2 + $0x2d8] sm:$0xff]
    %v195 = vld [vmem:[#allocation2 + $0x2e0] sm:$0xff]
    %v196 = vld [vmem:[#allocation2 + $0x2e8] sm:$0xff]
    %v197 = vld [vmem:[#allocation2 + $0x2f0] sm:$0xff]
    %v198 = vld [vmem:[#allocation2 + $0x2f8] sm:$0xff]
    %v199 = vld [vmem:[#allocation2 + $0x300] sm:$0xff]
    %v200 = vld [vmem:[#allocation2 + $0x308] sm:$0xff]
    %v201 = vld [vmem:[#allocation2 + $0x310] sm:$0xff]
    %v202 = vld [vmem:[#allocation2 + $0x318] sm:$0xff]
    %v203 = vld [vmem:[#allocation2 + $0x320] sm:$0xff]
    %v204 = vld [vmem:[#allocation2 + $0x328] sm:$0xff]
    %v205 = vld [vmem:[#allocation2 + $0x330] sm:$0xff]
    %v206 = vld [vmem:[#allocation2 + $0x338] sm:$0xff]
    %v207 = vld [vmem:[#allocation2 + $0x340] sm:$0xff]
    %v208 = vld [vmem:[#allocation2 + $0x348] sm:$0xff]
    %v209 = vld [vmem:[#allocation2 + $0x350] sm:$0xff]
    %v210 = vld [vmem:[#allocation2 + $0x358] sm:$0xff]
    %v211 = vld [vmem:[#allocation2 + $0x360] sm:$0xff]
    %v212 = vld [vmem:[#allocation2 + $0x368] sm:$0xff]
    %v213 = vld [vmem:[#allocation2 + $0x370] sm:$0xff]
    %v214 = vld [vmem:[#allocation2 + $0x378] sm:$0xff]
    %v215 = vld [vmem:[#allocation2 + $0x380] sm:$0xff]
    %v216 = vld [vmem:[#allocation2 + $0x388] sm:$0xff]
    %v217 = vld [vmem:[#allocation2 + $0x390] sm:$0xff]
    %v218 = vld [vmem:[#allocation2 + $0x398] sm:$0xff]
    %v219 = vld [vmem:[#allocation2 + $0x3a0] sm:$0xff]
    %v220 = vld [vmem:[#allocation2 + $0x3a8] sm:$0xff]
    %v221 = vld [vmem:[#allocation2 + $0x3b0] sm:$0xff]
    %v222 = vld [vmem:[#allocation2 + $0x3b8] sm:$0xff]
    %v223 = vld [vmem:[#allocation2 + $0x3c0] sm:$0xff]
    %v224 = vld [vmem:[#allocation2 + $0x3c8] sm:$0xff]
    %v225 = vld [vmem:[#allocation2 + $0x3d0] sm:$0xff]
    %v226 = vld [vmem:[#allocation2 + $0x3d8] sm:$0xff]
    %v227 = vld [vmem:[#allocation2 + $0x3e0] sm:$0xff]
    %v228 = vld [vmem:[#allocation2 + $0x3e8] sm:$0xff]
    %v229 = vld [vmem:[#allocation2 + $0x3f0] sm:$0xff]
    %v230 = vld [vmem:[#allocation2 + $0x3f8] sm:$0xff]
    %231 = vmatprep.subr.mxu0 0.0
    %232 = vmatpush1.msra.mxu0 %v103
    %233 = vmatprep.subr.mxu0 0.0
    %234 = vmatpush1.msra.mxu0 %v104
    %235 = vmatprep.subr.mxu0 0.0
    %236 = vmatpush1.msra.mxu0 %v105
    %237 = vmatprep.subr.mxu0 0.0
    %238 = vmatpush1.msra.mxu0 %v106
    %239 = vmatprep.subr.mxu0 0.0
    %240 = vmatpush1.msra.mxu0 %v107
    %241 = vmatprep.subr.mxu0 0.0
    %242 = vmatpush1.msra.mxu0 %v108
    %243 = vmatprep.subr.mxu0 0.0
    %244 = vmatpush1.msra.mxu0 %v109
    %245 = vmatprep.subr.mxu0 0.0
    %246 = vmatpush1.msra.mxu0 %v110
    %247 = vmatprep.subr.mxu0 0.0
    %248 = vmatpush1.msra.mxu0 %v111
    %249 = vmatprep.subr.mxu0 0.0
    %250 = vmatpush1.msra.mxu0 %v112
    %251 = vmatprep.subr.mxu0 0.0
    %252 = vmatpush1.msra.mxu0 %v113
    %253 = vmatprep.subr.mxu0 0.0
    %254 = vmatpush1.msra.mxu0 %v114
    %255 = vmatprep.subr.mxu0 0.0
    %256 = vmatpush1.msra.mxu0 %v115
    %257 = vmatprep.subr.mxu0 0.0
    %258 = vmatpush1.msra.mxu0 %v116
    %259 = vmatprep.subr.mxu0 0.0
    %260 = vmatpush1.msra.mxu0 %v117
    %261 = vmatprep.subr.mxu0 0.0
    %262 = vmatpush1.msra.mxu0 %v118
    %263 = vmatprep.subr.mxu0 0.0
    %264 = vmatpush1.msra.mxu0 %v119
    %265 = vmatprep.subr.mxu0 0.0
    %266 = vmatpush1.msra.mxu0 %v120
    %267 = vmatprep.subr.mxu0 0.0
    %268 = vmatpush1.msra.mxu0 %v121
    %269 = vmatprep.subr.mxu0 0.0
    %270 = vmatpush1.msra.mxu0 %v122
    %271 = vmatprep.subr.mxu0 0.0
    %272 = vmatpush1.msra.mxu0 %v123
    %273 = vmatprep.subr.mxu0 0.0
    %274 = vmatpush1.msra.mxu0 %v124
    %275 = vmatprep.subr.mxu0 0.0
    %276 = vmatpush1.msra.mxu0 %v125
    %277 = vmatprep.subr.mxu0 0.0
    %278 = vmatpush1.msra.mxu0 %v126
    %279 = vmatprep.subr.mxu0 0.0
    %280 = vmatpush1.msra.mxu0 %v127
    %281 = vmatprep.subr.mxu0 0.0
    %282 = vmatpush1.msra.mxu0 %v128
    %283 = vmatprep.subr.mxu0 0.0
    %284 = vmatpush1.msra.mxu0 %v129
    %285 = vmatprep.subr.mxu0 0.0
    %286 = vmatpush1.msra.mxu0 %v130
    %287 = vmatprep.subr.mxu0 0.0
    %288 = vmatpush1.msra.mxu0 %v131
    %289 = vmatprep.subr.mxu0 0.0
    %290 = vmatpush1.msra.mxu0 %v132
    %291 = vmatprep.subr.mxu0 0.0
    %292 = vmatpush1.msra.mxu0 %v133
    %293 = vmatprep.subr.mxu0 0.0
    %294 = vmatpush1.msra.mxu0 %v134
    %295 = vmatprep.mubr.f32.mxu0 %v96
    %296 = vmatmul.mubr.f32.gmra.mrb[0].mxu0 %v95
    %v297 = vpop.f32.mrb[0].mxu0
    %v298 = vadd.f32 0.0, %v297
    %v299 = vpop.f32.mrb[0].mxu0
    %300 = vdwg.mxu0
    %301 = vmatprep.subr.mxu0 0.0
    %302 = vmatpush1.msra.mxu0 %v135
    %303 = vmatprep.subr.mxu0 0.0
    %304 = vmatpush1.msra.mxu0 %v136
    %305 = vmatprep.subr.mxu0 0.0
    %306 = vmatpush1.msra.mxu0 %v137
    %307 = vmatprep.subr.mxu0 0.0
    %308 = vmatpush1.msra.mxu0 %v138
    %309 = vmatprep.subr.mxu0 0.0
    %310 = vmatpush1.msra.mxu0 %v139
    %311 = vmatprep.subr.mxu0 0.0
    %312 = vmatpush1.msra.mxu0 %v140
    %313 = vmatprep.subr.mxu0 0.0
    %314 = vmatpush1.msra.mxu0 %v141
    %315 = vmatprep.subr.mxu0 0.0
    %316 = vmatpush1.msra.mxu0 %v142
    %317 = vmatprep.subr.mxu0 0.0
    %318 = vmatpush1.msra.mxu0 %v143
    %319 = vmatprep.subr.mxu0 0.0
    %320 = vmatpush1.msra.mxu0 %v144
    %321 = vmatprep.subr.mxu0 0.0
    %322 = vmatpush1.msra.mxu0 %v145
    %323 = vmatprep.subr.mxu0 0.0
    %324 = vmatpush1.msra.mxu0 %v146
    %325 = vmatprep.subr.mxu0 0.0
    %326 = vmatpush1.msra.mxu0 %v147
    %327 = vmatprep.subr.mxu0 0.0
    %328 = vmatpush1.msra.mxu0 %v148
    %329 = vmatprep.subr.mxu0 0.0
    %330 = vmatpush1.msra.mxu0 %v149
    %331 = vmatprep.subr.mxu0 0.0
    %332 = vmatpush1.msra.mxu0 %v150
    %333 = vmatprep.subr.mxu0 0.0
    %334 = vmatpush1.msra.mxu0 %v151
    %335 = vmatprep.subr.mxu0 0.0
    %336 = vmatpush1.msra.mxu0 %v152
    %337 = vmatprep.subr.mxu0 0.0
    %338 = vmatpush1.msra.mxu0 %v153
    %339 = vmatprep.subr.mxu0 0.0
    %340 = vmatpush1.msra.mxu0 %v154
    %341 = vmatprep.subr.mxu0 0.0
    %342 = vmatpush1.msra.mxu0 %v155
    %343 = vmatprep.subr.mxu0 0.0
    %344 = vmatpush1.msra.mxu0 %v156
    %345 = vmatprep.subr.mxu0 0.0
    %346 = vmatpush1.msra.mxu0 %v157
    %347 = vmatprep.subr.mxu0 0.0
    %348 = vmatpush1.msra.mxu0 %v158
    %349 = vmatprep.subr.mxu0 0.0
    %350 = vmatpush1.msra.mxu0 %v159
    %351 = vmatprep.subr.mxu0 0.0
    %352 = vmatpush1.msra.mxu0 %v160
    %353 = vmatprep.subr.mxu0 0.0
    %354 = vmatpush1.msra.mxu0 %v161
    %355 = vmatprep.subr.mxu0 0.0
    %356 = vmatpush1.msra.mxu0 %v162
    %357 = vmatprep.subr.mxu0 0.0
    %358 = vmatpush1.msra.mxu0 %v163
    %359 = vmatprep.subr.mxu0 0.0
    %360 = vmatpush1.msra.mxu0 %v164
    %361 = vmatprep.subr.mxu0 0.0
    %362 = vmatpush1.msra.mxu0 %v165
    %363 = vmatprep.subr.mxu0 0.0
    %364 = vmatpush1.msra.mxu0 %v166
    %365 = vmatprep.mubr.f32.mxu0 %v98
    %366 = vmatmul.mubr.f32.gmra.mrb[0].mxu0 %v97
    %v367 = vpop.f32.mrb[0].mxu0
    %v368 = vadd.f32 %v298, %v367
    %v369 = vpop.f32.mrb[0].mxu0
    %370 = vdwg.mxu0
    %371 = vmatprep.subr.mxu0 0.0
    %372 = vmatpush1.msra.mxu0 %v167
    %373 = vmatprep.subr.mxu0 0.0
    %374 = vmatpush1.msra.mxu0 %v168
    %375 = vmatprep.subr.mxu0 0.0
    %376 = vmatpush1.msra.mxu0 %v169
    %377 = vmatprep.subr.mxu0 0.0
    %378 = vmatpush1.msra.mxu0 %v170
    %379 = vmatprep.subr.mxu0 0.0
    %380 = vmatpush1.msra.mxu0 %v171
    %381 = vmatprep.subr.mxu0 0.0
    %382 = vmatpush1.msra.mxu0 %v172
    %383 = vmatprep.subr.mxu0 0.0
    %384 = vmatpush1.msra.mxu0 %v173
    %385 = vmatprep.subr.mxu0 0.0
    %386 = vmatpush1.msra.mxu0 %v174
    %387 = vmatprep.subr.mxu0 0.0
    %388 = vmatpush1.msra.mxu0 %v175
    %389 = vmatprep.subr.mxu0 0.0
    %390 = vmatpush1.msra.mxu0 %v176
    %391 = vmatprep.subr.mxu0 0.0
    %392 = vmatpush1.msra.mxu0 %v177
    %393 = vmatprep.subr.mxu0 0.0
    %394 = vmatpush1.msra.mxu0 %v178
    %395 = vmatprep.subr.mxu0 0.0
    %396 = vmatpush1.msra.mxu0 %v179
    %397 = vmatprep.subr.mxu0 0.0
    %398 = vmatpush1.msra.mxu0 %v180
    %399 = vmatprep.subr.mxu0 0.0
    %400 = vmatpush1.msra.mxu0 %v181
    %401 = vmatprep.subr.mxu0 0.0
    %402 = vmatpush1.msra.mxu0 %v182
    %403 = vmatprep.subr.mxu0 0.0
    %404 = vmatpush1.msra.mxu0 %v183
    %405 = vmatprep.subr.mxu0 0.0
    %406 = vmatpush1.msra.mxu0 %v184
    %407 = vmatprep.subr.mxu0 0.0
    %408 = vmatpush1.msra.mxu0 %v185
    %409 = vmatprep.subr.mxu0 0.0
    %410 = vmatpush1.msra.mxu0 %v186
    %411 = vmatprep.subr.mxu0 0.0
    %412 = vmatpush1.msra.mxu0 %v187
    %413 = vmatprep.subr.mxu0 0.0
    %414 = vmatpush1.msra.mxu0 %v188
    %415 = vmatprep.subr.mxu0 0.0
    %416 = vmatpush1.msra.mxu0 %v189
    %417 = vmatprep.subr.mxu0 0.0
    %418 = vmatpush1.msra.mxu0 %v190
    %419 = vmatprep.subr.mxu0 0.0
    %420 = vmatpush1.msra.mxu0 %v191
    %421 = vmatprep.subr.mxu0 0.0
    %422 = vmatpush1.msra.mxu0 %v192
    %423 = vmatprep.subr.mxu0 0.0
    %424 = vmatpush1.msra.mxu0 %v193
    %425 = vmatprep.subr.mxu0 0.0
    %426 = vmatpush1.msra.mxu0 %v194
    %427 = vmatprep.subr.mxu0 0.0
    %428 = vmatpush1.msra.mxu0 %v195
    %429 = vmatprep.subr.mxu0 0.0
    %430 = vmatpush1.msra.mxu0 %v196
    %431 = vmatprep.subr.mxu0 0.0
    %432 = vmatpush1.msra.mxu0 %v197
    %433 = vmatprep.subr.mxu0 0.0
    %434 = vmatpush1.msra.mxu0 %v198
    %435 = vmatprep.mubr.f32.mxu0 %v100
    %436 = vmatmul.mubr.f32.gmra.mrb[0].mxu0 %v99
    %v437 = vpop.f32.mrb[0].mxu0
    %v438 = vadd.f32 %v368, %v437
    %v439 = vpop.f32.mrb[0].mxu0
    %440 = vdwg.mxu0
    %441 = vmatprep.subr.mxu0 0.0
    %442 = vmatpush1.msra.mxu0 %v199
    %443 = vmatprep.subr.mxu0 0.0
    %444 = vmatpush1.msra.mxu0 %v200
    %445 = vmatprep.subr.mxu0 0.0
    %446 = vmatpush1.msra.mxu0 %v201
    %447 = vmatprep.subr.mxu0 0.0
    %448 = vmatpush1.msra.mxu0 %v202
    %449 = vmatprep.subr.mxu0 0.0
    %450 = vmatpush1.msra.mxu0 %v203
    %451 = vmatprep.subr.mxu0 0.0
    %452 = vmatpush1.msra.mxu0 %v204
    %453 = vmatprep.subr.mxu0 0.0
    %454 = vmatpush1.msra.mxu0 %v205
    %455 = vmatprep.subr.mxu0 0.0
    %456 = vmatpush1.msra.mxu0 %v206
    %457 = vmatprep.subr.mxu0 0.0
    %458 = vmatpush1.msra.mxu0 %v207
    %459 = vmatprep.subr.mxu0 0.0
    %460 = vmatpush1.msra.mxu0 %v208
    %461 = vmatprep.subr.mxu0 0.0
    %462 = vmatpush1.msra.mxu0 %v209
    %463 = vmatprep.subr.mxu0 0.0
    %464 = vmatpush1.msra.mxu0 %v210
    %465 = vmatprep.subr.mxu0 0.0
    %466 = vmatpush1.msra.mxu0 %v211
    %467 = vmatprep.subr.mxu0 0.0
    %468 = vmatpush1.msra.mxu0 %v212
    %469 = vmatprep.subr.mxu0 0.0
    %470 = vmatpush1.msra.mxu0 %v213
    %471 = vmatprep.subr.mxu0 0.0
    %472 = vmatpush1.msra.mxu0 %v214
    %473 = vmatprep.subr.mxu0 0.0
    %474 = vmatpush1.msra.mxu0 %v215
    %475 = vmatprep.subr.mxu0 0.0
    %476 = vmatpush1.msra.mxu0 %v216
    %477 = vmatprep.subr.mxu0 0.0
    %478 = vmatpush1.msra.mxu0 %v217
    %479 = vmatprep.subr.mxu0 0.0
    %480 = vmatpush1.msra.mxu0 %v218
    %481 = vmatprep.subr.mxu0 0.0
    %482 = vmatpush1.msra.mxu0 %v219
    %483 = vmatprep.subr.mxu0 0.0
    %484 = vmatpush1.msra.mxu0 %v220
    %485 = vmatprep.subr.mxu0 0.0
    %486 = vmatpush1.msra.mxu0 %v221
    %487 = vmatprep.subr.mxu0 0.0
    %488 = vmatpush1.msra.mxu0 %v222
    %489 = vmatprep.subr.mxu0 0.0
    %490 = vmatpush1.msra.mxu0 %v223
    %491 = vmatprep.subr.mxu0 0.0
    %492 = vmatpush1.msra.mxu0 %v224
    %493 = vmatprep.subr.mxu0 0.0
    %494 = vmatpush1.msra.mxu0 %v225
    %495 = vmatprep.subr.mxu0 0.0
    %496 = vmatpush1.msra.mxu0 %v226
    %497 = vmatprep.subr.mxu0 0.0
    %498 = vmatpush1.msra.mxu0 %v227
    %499 = vmatprep.subr.mxu0 0.0
    %500 = vmatpush1.msra.mxu0 %v228
    %501 = vmatprep.subr.mxu0 0.0
    %502 = vmatpush1.msra.mxu0 %v229
    %503 = vmatprep.subr.mxu0 0.0
    %504 = vmatpush1.msra.mxu0 %v230
    %505 = vmatprep.mubr.f32.mxu0 %v102
    %506 = vmatmul.mubr.f32.gmra.mrb[0].mxu0 %v101
    %v507 = vpop.f32.mrb[0].mxu0
    %v508 = vadd.f32 %v438, %v507
    %v509 = vpop.f32.mrb[0].mxu0
    %510 = vdwg.mxu0
    %v511 = vpack.c.bf16 %v508, %v508
    %v512 = vld [vmem:[#allocation5] sm:$0xff]
    %v513 = vld [vmem:[#allocation5 + $0x8] sm:$0xff]
    %v514 = vld [vmem:[#allocation5 + $0x10] sm:$0xff]
    %v515 = vld [vmem:[#allocation5 + $0x18] sm:$0xff]
    %v516 = vld [vmem:[#allocation5 + $0x20] sm:$0xff]
    %v517 = vld [vmem:[#allocation5 + $0x28] sm:$0xff]
    %v518 = vld [vmem:[#allocation5 + $0x30] sm:$0xff]
    %v519 = vld [vmem:[#allocation5 + $0x38] sm:$0xff]
    %v520 = vld [vmem:[#allocation5 + $0x40] sm:$0xff]
    %v521 = vld [vmem:[#allocation5 + $0x48] sm:$0xff]
    %v522 = vld [vmem:[#allocation5 + $0x50] sm:$0xff]
    %v523 = vld [vmem:[#allocation5 + $0x58] sm:$0xff]
    %v524 = vld [vmem:[#allocation5 + $0x60] sm:$0xff]
    %v525 = vld [vmem:[#allocation5 + $0x68] sm:$0xff]
    %v526 = vld [vmem:[#allocation5 + $0x70] sm:$0xff]
    %v527 = vld [vmem:[#allocation5 + $0x78] sm:$0xff]
    %v528 = vld [vmem:[%s3] sm:$0x3]
    %v530 = vlaneseq
    %v531 = vshrl.u32 %v530, 7
    %v532 = vsub.s32 0, %v531
    %v533 = vrot.slane %v528, %v532
    %v534 = vlaneseq
    %v535 = vshrl.u32 %v534, 7
    %v536 = vsub.s32 1, %v535
    %v537 = vrot.slane %v528, %v536
    %v556 = vunpack.c.l.b16 %v512
    %v557 = vunpack.c.h.b16 %v512
    %v558 = vunpack.c.l.b16 %v513
    %v559 = vunpack.c.h.b16 %v513
    %v560 = vunpack.c.l.b16 %v514
    %v561 = vunpack.c.h.b16 %v514
    %v562 = vunpack.c.l.b16 %v515
    %v563 = vunpack.c.h.b16 %v515
    %v564 = vunpack.c.l.b16 %v516
    %v565 = vunpack.c.h.b16 %v516
    %v566 = vunpack.c.l.b16 %v517
    %v567 = vunpack.c.h.b16 %v517
    %v568 = vunpack.c.l.b16 %v518
    %v569 = vunpack.c.h.b16 %v518
    %v570 = vunpack.c.l.b16 %v519
    %v571 = vunpack.c.h.b16 %v519
    %v572 = vunpack.c.l.b16 %v520
    %v573 = vunpack.c.h.b16 %v520
    %v574 = vunpack.c.l.b16 %v521
    %v575 = vunpack.c.h.b16 %v521
    %v576 = vunpack.c.l.b16 %v522
    %v577 = vunpack.c.h.b16 %v522
    %v578 = vunpack.c.l.b16 %v523
    %v579 = vunpack.c.h.b16 %v523
    %v580 = vunpack.c.l.b16 %v524
    %v581 = vunpack.c.h.b16 %v524
    %v582 = vunpack.c.l.b16 %v525
    %v583 = vunpack.c.h.b16 %v525
    %v584 = vunpack.c.l.b16 %v526
    %v585 = vunpack.c.h.b16 %v526
    %v586 = vunpack.c.l.b16 %v527
    %v587 = vunpack.c.h.b16 %v527
    %v588 = vpack.c.b16 %v558, %v556
    %v589 = vpack.c.b16 %v559, %v557
    %v590 = vpack.c.b16 %v562, %v560
    %v591 = vpack.c.b16 %v563, %v561
    %v592 = vpack.c.b16 %v566, %v564
    %v593 = vpack.c.b16 %v567, %v565
    %v594 = vpack.c.b16 %v570, %v568
    %v595 = vpack.c.b16 %v571, %v569
    %v596 = vpack.c.b16 %v574, %v572
    %v597 = vpack.c.b16 %v575, %v573
    %v598 = vpack.c.b16 %v578, %v576
    %v599 = vpack.c.b16 %v579, %v577
    %v600 = vpack.c.b16 %v582, %v580
    %v601 = vpack.c.b16 %v583, %v581
    %v602 = vpack.c.b16 %v586, %v584
    %v603 = vpack.c.b16 %v587, %v585
    %620 = vmatprep.subr.bf16.mxu0 %v589
    %621 = vmatpush1.bf16.msra.mxu0 %v588
    %622 = vmatprep.subr.bf16.mxu0 %v591
    %623 = vmatpush1.bf16.msra.mxu0 %v590
    %624 = vmatprep.subr.bf16.mxu0 %v593
    %625 = vmatpush1.bf16.msra.mxu0 %v592
    %626 = vmatprep.subr.bf16.mxu0 %v595
    %627 = vmatpush1.bf16.msra.mxu0 %v594
    %628 = vmatprep.subr.bf16.mxu0 %v597
    %629 = vmatpush1.bf16.msra.mxu0 %v596
    %630 = vmatprep.subr.bf16.mxu0 %v599
    %631 = vmatpush1.bf16.msra.mxu0 %v598
    %632 = vmatprep.subr.bf16.mxu0 %v601
    %633 = vmatpush1.bf16.msra.mxu0 %v600
    %634 = vmatprep.subr.bf16.mxu0 %v603
    %635 = vmatpush1.bf16.msra.mxu0 %v602
    %636 = vmatprep.subr.bf16.mxu0 0
    %637 = vmatpush1.bf16.msra.mxu0 0
    %638 = vmatprep.subr.bf16.mxu0 0
    %639 = vmatpush1.bf16.msra.mxu0 0
    %640 = vmatprep.subr.bf16.mxu0 0
    %641 = vmatpush1.bf16.msra.mxu0 0
    %642 = vmatprep.subr.bf16.mxu0 0
    %643 = vmatpush1.bf16.msra.mxu0 0
    %644 = vmatprep.subr.bf16.mxu0 0
    %645 = vmatpush1.bf16.msra.mxu0 0
    %646 = vmatprep.subr.bf16.mxu0 0
    %647 = vmatpush1.bf16.msra.mxu0 0
    %648 = vmatprep.subr.bf16.mxu0 0
    %649 = vmatpush1.bf16.msra.mxu0 0
    %650 = vmatprep.subr.bf16.mxu0 0
    %651 = vmatpush1.bf16.msra.mxu0 0
    %652 = vmatprep.mubr.bf16.mxu0 0
    %653 = vmatmul.mubr.bf16.gmra.mrb[0].mxu0 %v511
    %v654 = vpop.f32.mrb[0].mxu0
    %v655 = vadd.f32 %v533, %v654
    %v656 = vpop.f32.mrb[0].mxu0
    %v657 = vadd.f32 %v537, %v656
    %v658 = vpop.f32.mrb[0].mxu0
    %v659 = vpop.f32.mrb[0].mxu0
    %660 = vdwg.mxu0
    %v661 = vmul.f32 %v655, 0.5
    %v662 = vmul.f32 %v657, 0.5
    %v663 = vtanh.pop %v661
    %v664 = vtanh.pop %v662
    %v665 = vadd.f32 %v663, 1.0
    %v666 = vadd.f32 %v664, 1.0
    %v667 = vmul.f32 %v665, 0.5
    %v668 = vmul.f32 %v666, 0.5
    %v669 = vmul.f32 %v655, %v667
    %v670 = vmul.f32 %v657, %v668
    %v671 = vpack.c.bf16 %v669, %v669
    %v672 = vpack.c.bf16 %v670, %v670
    %v673 = vld [vmem:[#allocation7] sm:$0xff]
    %v674 = vld [vmem:[#allocation7 + $0x8] sm:$0xff]
    %v675 = vld [vmem:[#allocation7 + $0x10] sm:$0xff]
    %v676 = vld [vmem:[#allocation7 + $0x18] sm:$0xff]
    %v677 = vld [vmem:[#allocation7 + $0x20] sm:$0xff]
    %v678 = vld [vmem:[#allocation7 + $0x28] sm:$0xff]
    %v679 = vld [vmem:[#allocation7 + $0x30] sm:$0xff]
    %v680 = vld [vmem:[#allocation7 + $0x38] sm:$0xff]
    %v681 = vld [vmem:[#allocation7 + $0x40] sm:$0xff]
    %v682 = vld [vmem:[#allocation7 + $0x48] sm:$0xff]
    %v683 = vld [vmem:[#allocation7 + $0x50] sm:$0xff]
    %v684 = vld [vmem:[#allocation7 + $0x58] sm:$0xff]
    %v685 = vld [vmem:[#allocation7 + $0x60] sm:$0xff]
    %v686 = vld [vmem:[#allocation7 + $0x68] sm:$0xff]
    %v687 = vld [vmem:[#allocation7 + $0x70] sm:$0xff]
    %v688 = vld [vmem:[#allocation7 + $0x78] sm:$0xff]
    %v689 = vld [vmem:[#allocation7 + $0x80] sm:$0xff]
    %v690 = vld [vmem:[#allocation7 + $0x88] sm:$0xff]
    %v691 = vld [vmem:[#allocation7 + $0x90] sm:$0xff]
    %v692 = vld [vmem:[#allocation7 + $0x98] sm:$0xff]
    %v693 = vld [vmem:[#allocation7 + $0xa0] sm:$0xff]
    %v694 = vld [vmem:[#allocation7 + $0xa8] sm:$0xff]
    %v695 = vld [vmem:[#allocation7 + $0xb0] sm:$0xff]
    %v696 = vld [vmem:[#allocation7 + $0xb8] sm:$0xff]
    %v697 = vld [vmem:[#allocation7 + $0xc0] sm:$0xff]
    %v698 = vld [vmem:[#allocation7 + $0xc8] sm:$0xff]
    %v699 = vld [vmem:[#allocation7 + $0xd0] sm:$0xff]
    %v700 = vld [vmem:[#allocation7 + $0xd8] sm:$0xff]
    %v701 = vld [vmem:[#allocation7 + $0xe0] sm:$0xff]
    %v702 = vld [vmem:[#allocation7 + $0xe8] sm:$0xff]
    %v703 = vld [vmem:[#allocation7 + $0xf0] sm:$0xff]
    %v704 = vld [vmem:[#allocation7 + $0xf8] sm:$0xff]
    %v705 = vld [vmem:[%s5] sm:$0x3]
    %v707 = vlaneseq
    %v708 = vshrl.u32 %v707, 7
    %v709 = vsub.s32 0, %v708
    %v710 = vrot.slane %v705, %v709
    %v711 = vlaneseq
    %v712 = vshrl.u32 %v711, 7
    %v713 = vsub.s32 1, %v712
    %v714 = vrot.slane %v705, %v713
    %v749 = vunpack.c.l.b16 %v673
    %v750 = vunpack.c.h.b16 %v673
    %v751 = vunpack.c.l.b16 %v674
    %v752 = vunpack.c.h.b16 %v674
    %v753 = vunpack.c.l.b16 %v675
    %v754 = vunpack.c.h.b16 %v675
    %v755 = vunpack.c.l.b16 %v676
    %v756 = vunpack.c.h.b16 %v676
    %v757 = vunpack.c.l.b16 %v677
    %v758 = vunpack.c.h.b16 %v677
    %v759 = vunpack.c.l.b16 %v678
    %v760 = vunpack.c.h.b16 %v678
    %v761 = vunpack.c.l.b16 %v679
    %v762 = vunpack.c.h.b16 %v679
    %v763 = vunpack.c.l.b16 %v680
    %v764 = vunpack.c.h.b16 %v680
    %v765 = vunpack.c.l.b16 %v681
    %v766 = vunpack.c.h.b16 %v681
    %v767 = vunpack.c.l.b16 %v682
    %v768 = vunpack.c.h.b16 %v682
    %v769 = vunpack.c.l.b16 %v683
    %v770 = vunpack.c.h.b16 %v683
    %v771 = vunpack.c.l.b16 %v684
    %v772 = vunpack.c.h.b16 %v684
    %v773 = vunpack.c.l.b16 %v685
    %v774 = vunpack.c.h.b16 %v685
    %v775 = vunpack.c.l.b16 %v686
    %v776 = vunpack.c.h.b16 %v686
    %v777 = vunpack.c.l.b16 %v687
    %v778 = vunpack.c.h.b16 %v687
    %v779 = vunpack.c.l.b16 %v688
    %v780 = vunpack.c.h.b16 %v688
    %v781 = vunpack.c.l.b16 %v689
    %v782 = vunpack.c.h.b16 %v689
    %v783 = vunpack.c.l.b16 %v690
    %v784 = vunpack.c.h.b16 %v690
    %v785 = vunpack.c.l.b16 %v691
    %v786 = vunpack.c.h.b16 %v691
    %v787 = vunpack.c.l.b16 %v692
    %v788 = vunpack.c.h.b16 %v692
    %v789 = vunpack.c.l.b16 %v693
    %v790 = vunpack.c.h.b16 %v693
    %v791 = vunpack.c.l.b16 %v694
    %v792 = vunpack.c.h.b16 %v694
    %v793 = vunpack.c.l.b16 %v695
    %v794 = vunpack.c.h.b16 %v695
    %v795 = vunpack.c.l.b16 %v696
    %v796 = vunpack.c.h.b16 %v696
    %v797 = vunpack.c.l.b16 %v697
    %v798 = vunpack.c.h.b16 %v697
    %v799 = vunpack.c.l.b16 %v698
    %v800 = vunpack.c.h.b16 %v698
    %v801 = vunpack.c.l.b16 %v699
    %v802 = vunpack.c.h.b16 %v699
    %v803 = vunpack.c.l.b16 %v700
    %v804 = vunpack.c.h.b16 %v700
    %v805 = vunpack.c.l.b16 %v701
    %v806 = vunpack.c.h.b16 %v701
    %v807 = vunpack.c.l.b16 %v702
    %v808 = vunpack.c.h.b16 %v702
    %v809 = vunpack.c.l.b16 %v703
    %v810 = vunpack.c.h.b16 %v703
    %v811 = vunpack.c.l.b16 %v704
    %v812 = vunpack.c.h.b16 %v704
    %v813 = vpack.c.b16 %v751, %v749
    %v814 = vpack.c.b16 %v752, %v750
    %v815 = vpack.c.b16 %v755, %v753
    %v816 = vpack.c.b16 %v756, %v754
    %v817 = vpack.c.b16 %v759, %v757
    %v818 = vpack.c.b16 %v760, %v758
    %v819 = vpack.c.b16 %v763, %v761
    %v820 = vpack.c.b16 %v764, %v762
    %v821 = vpack.c.b16 %v767, %v765
    %v822 = vpack.c.b16 %v768, %v766
    %v823 = vpack.c.b16 %v771, %v769
    %v824 = vpack.c.b16 %v772, %v770
    %v825 = vpack.c.b16 %v775, %v773
    %v826 = vpack.c.b16 %v776, %v774
    %v827 = vpack.c.b16 %v779, %v777
    %v828 = vpack.c.b16 %v780, %v778
    %v829 = vpack.c.b16 %v783, %v781
    %v830 = vpack.c.b16 %v784, %v782
    %v831 = vpack.c.b16 %v787, %v785
    %v832 = vpack.c.b16 %v788, %v786
    %v833 = vpack.c.b16 %v791, %v789
    %v834 = vpack.c.b16 %v792, %v790
    %v835 = vpack.c.b16 %v795, %v793
    %v836 = vpack.c.b16 %v796, %v794
    %v837 = vpack.c.b16 %v799, %v797
    %v838 = vpack.c.b16 %v800, %v798
    %v839 = vpack.c.b16 %v803, %v801
    %v840 = vpack.c.b16 %v804, %v802
    %v841 = vpack.c.b16 %v807, %v805
    %v842 = vpack.c.b16 %v808, %v806
    %v843 = vpack.c.b16 %v811, %v809
    %v844 = vpack.c.b16 %v812, %v810
    %877 = vmatprep.subr.bf16.mxu0 %v814
    %878 = vmatpush1.bf16.msra.mxu0 %v813
    %879 = vmatprep.subr.bf16.mxu0 %v816
    %880 = vmatpush1.bf16.msra.mxu0 %v815
    %881 = vmatprep.subr.bf16.mxu0 %v818
    %882 = vmatpush1.bf16.msra.mxu0 %v817
    %883 = vmatprep.subr.bf16.mxu0 %v820
    %884 = vmatpush1.bf16.msra.mxu0 %v819
    %885 = vmatprep.subr.bf16.mxu0 %v822
    %886 = vmatpush1.bf16.msra.mxu0 %v821
    %887 = vmatprep.subr.bf16.mxu0 %v824
    %888 = vmatpush1.bf16.msra.mxu0 %v823
    %889 = vmatprep.subr.bf16.mxu0 %v826
    %890 = vmatpush1.bf16.msra.mxu0 %v825
    %891 = vmatprep.subr.bf16.mxu0 %v828
    %892 = vmatpush1.bf16.msra.mxu0 %v827
    %893 = vmatprep.subr.bf16.mxu0 %v830
    %894 = vmatpush1.bf16.msra.mxu0 %v829
    %895 = vmatprep.subr.bf16.mxu0 %v832
    %896 = vmatpush1.bf16.msra.mxu0 %v831
    %897 = vmatprep.subr.bf16.mxu0 %v834
    %898 = vmatpush1.bf16.msra.mxu0 %v833
    %899 = vmatprep.subr.bf16.mxu0 %v836
    %900 = vmatpush1.bf16.msra.mxu0 %v835
    %901 = vmatprep.subr.bf16.mxu0 %v838
    %902 = vmatpush1.bf16.msra.mxu0 %v837
    %903 = vmatprep.subr.bf16.mxu0 %v840
    %904 = vmatpush1.bf16.msra.mxu0 %v839
    %905 = vmatprep.subr.bf16.mxu0 %v842
    %906 = vmatpush1.bf16.msra.mxu0 %v841
    %907 = vmatprep.subr.bf16.mxu0 %v844
    %908 = vmatpush1.bf16.msra.mxu0 %v843
    %909 = vmatprep.mubr.bf16.mxu0 %v672
    %910 = vmatmul.mubr.bf16.gmra.mrb[0].mxu0 %v671
    %v911 = vpop.f32.mrb[0].mxu0
    %v912 = vadd.f32 %v710, %v911
    %v913 = vpop.f32.mrb[0].mxu0
    %v914 = vadd.f32 %v714, %v913
    %v915 = vpop.f32.mrb[0].mxu0
    %v916 = vpop.f32.mrb[0].mxu0
    %917 = vdwg.mxu0
    %v918 = vpack.c.bf16 %v912, %v912
    %v919 = vpack.c.bf16 %v914, %v914
    %v922 = vunpack.c.l.b16 %v918
    %v923 = vunpack.c.l.b16 %v919
    %v924 = vpack.c.b16 %v923, %v922
    %926 = vst [vmem:[#allocation8] sm:$0xff] %v924
    // Predicated region
    $region38: #{tpu_custom_call.1} parent=1 // pred_check
      _
    $region39: #{tpu_custom_call.1} parent=1 // pred_check_branch
      %928 = sbr.rel (0) target = $region41
    $region40: #{tpu_custom_call.1} parent=1 // pred_region
      %s930 = ssub.s32 128, 128
      %931 = vsyncadd [#allocation4], %s930
      %s933 = sshll.u32 [#allocation8], 4
      %s934 = int_to_ptr.vmem [resolvable:$true] %s933
      %936 = dma.vmem_to_hbm [thread:$0]  %s934, 128, %s6, [#allocation4]
    $region41: #{tpu_custom_call.1} parent=1 // pred_fallthru
      _
    // Predicated region
    $region42: #{tpu_custom_call.1} parent=1 // pred_check
      _
    $region43: #{tpu_custom_call.1} parent=1 // pred_check_branch
      %938 = sbr.rel (0) target = $region45
    $region44: #{tpu_custom_call.1} parent=1 // pred_region
      %939 = dma.done [#allocation4], 128
    $region45: #{tpu_custom_call.1} parent=1 // pred_fallthru
      _
    %940 = vsyncpa [#allocation3], 1
    %941 = vsyncpa [#allocation6], 1
    %942 = vsyncpa [#allocation4], 1

</llo_original>
